<compile_context>
chip_gen: v7x
topology: tpu7x:2x2x1
jax: 0.10.0
libtpu: 0.0.40
codegen_flags: <defaults>
</compile_context>

<pallas_src>
import jax
import jax.numpy as jnp
from jax import lax
from jax.experimental import pallas as pl
from jax.experimental.pallas import tpu as pltpu


def discriminator_kernel(ids_ref, slab1_ref, slab2_ref, out_ref):
    # slab1: rows [0, VP)        -> fused = embedding @ W_ih + b   (VP, 8H)
    #        rows [VP, VP + 2H)  -> block-diagonal W_hh            (2H, 8H)
    # slab2: rows [0, 2H)        -> W1 (2H, H)
    #        row  2H             -> b1 (1, H)
    #        row  2H + 1         -> W2^T (1, H)
    #        row  2H + 2         -> b2 broadcast across lanes (1, H)
    TBP = ids_ref.shape[0]            # T * Bp (time-major rows)
    BP = out_ref.shape[0]
    T = TBP // BP
    H = slab2_ref.shape[1]
    H2 = 2 * H
    H8 = 8 * H
    VP = slab1_ref.shape[0] - H2

    # ---- Embedding gather + W_ih + bias in ONE one-hot matmul --------------
    ids = ids_ref[...]                                                # (TBP, 1) int32
    onehot = (lax.broadcasted_iota(jnp.int32, (TBP, VP), 1) == ids).astype(jnp.float32)
    gx = jnp.dot(onehot, slab1_ref[0:VP, :],
                 preferred_element_type=jnp.float32)                  # (TBP, 8H)

    # Column layout (interleaved per gate block of width 2H):
    #   [ i_f i_b | f_f f_b | g_f g_b | o_f o_b ]
    lane = lax.broadcasted_iota(jnp.int32, (BP, H8), 1)
    fwd_mask = (lane % H2) < H                      # forward-direction columns
    g_mask = (lane >= 4 * H) & (lane < 6 * H)       # g-gate block -> tanh
    g_scale = jnp.where(g_mask, 2.0, 1.0).astype(jnp.float32)
    g_shift = jnp.where(g_mask, 1.0, 0.0).astype(jnp.float32)

    # Hoisted direction select: forward columns read x_t, backward columns
    # read x_{T-1-t}.  Off the serial chain, so do it once up front.
    gx_steps = [
        jnp.where(fwd_mask,
                  gx[t * BP:(t + 1) * BP, :],
                  gx[(T - 1 - t) * BP:(T - t) * BP, :])
        for t in range(T)
    ]

    whh = slab1_ref[VP:VP + H2, :]                  # (2H, 8H) block-diag per direction

    h_cat = jnp.zeros((BP, H2), jnp.float32)        # [h_fwd | h_bwd]
    c_cat = jnp.zeros((BP, H2), jnp.float32)
    m_cat = jnp.full((BP, H2), -jnp.inf, jnp.float32)

    # ---- Fused fwd+bwd recurrence, fully unrolled over T -------------------
    for t in range(T):
        gates = gx_steps[t] + jnp.dot(h_cat, whh,
                                      preferred_element_type=jnp.float32)  # (BP, 8H)
        # Single full-width EUP pass: tanh(x) = 2*sigmoid(2x) - 1 on the g block.
        s = jax.nn.sigmoid(gates * g_scale)
        act = s * g_scale - g_shift
        i_cat = act[:, 0 * H2:1 * H2]
        f_cat = act[:, 1 * H2:2 * H2]
        g_cat = act[:, 2 * H2:3 * H2]
        o_cat = act[:, 3 * H2:4 * H2]
        c_cat = f_cat * c_cat + i_cat * g_cat
        h_cat = o_cat * jnp.tanh(c_cat)
        m_cat = jnp.maximum(m_cat, h_cat)

    # torch.max over time of concat(h_fwd, h_bwd) == concat of per-direction maxes
    pooled = m_cat                                                    # (BP, 2H)

    w1 = slab2_ref[0:H2, :]                                           # (2H, H)
    b1 = slab2_ref[H2:H2 + 1, :]                                      # (1, H)
    w2_row = slab2_ref[H2 + 1:H2 + 2, :]                              # (1, H)
    b2 = slab2_ref[H2 + 2:H2 + 3, 0:1]                                # (1, 1)

    # fc1 + relu
    x = jnp.maximum(
        jnp.dot(pooled, w1, preferred_element_type=jnp.float32) + b1, 0.0)
    # TODO(synk): nn.Dropout(0.3) is identity in eval mode; training-mode dropout omitted.
    # fc2 + sigmoid (1-lane output -> lane reduce instead of a 1-column matmul)
    logits = jnp.sum(x * w2_row, axis=-1, keepdims=True) + b2
    out_ref[...] = jax.nn.sigmoid(logits)


def _interleave_gates(wf, wb):
    """Pack per-direction gate weights (K, 4H) into (K, 8H) with layout
    [i_f i_b | f_f f_b | g_f g_b | o_f o_b] (each sub-block H columns)."""
    H = wf.shape[1] // 4
    cols = []
    for k in range(4):
        cols.append(wf[:, k * H:(k + 1) * H])
        cols.append(wb[:, k * H:(k + 1) * H])
    return jnp.concatenate(cols, axis=1)


def discriminator_forward(prev_chars, params):
    """prev_chars: int32 (B, T) token ids.  Returns (B, 1) float32 probabilities."""
    B, T = prev_chars.shape
    H = params["whh_f"].shape[0]
    V = params["embedding"].shape[0]
    BP = max(8, ((B + 7) // 8) * 8)   # pad batch to a full sublane group
    VP = ((V + 7) // 8) * 8           # keep whh rows sublane-aligned in the slab

    # --- one-time packing of weights into two flat slabs (2 weight DMAs) ----
    wih = _interleave_gates(params["wih_f"], params["wih_b"])               # (E, 8H)
    b_cat = _interleave_gates(params["b_f"], params["b_b"])                 # (1, 8H)
    whh = jnp.concatenate(
        [_interleave_gates(params["whh_f"], jnp.zeros_like(params["whh_b"])),
         _interleave_gates(jnp.zeros_like(params["whh_f"]), params["whh_b"])],
        axis=0)                                                             # (2H, 8H)

    # Fuse embedding lookup with W_ih and fold in the gate bias (exact for
    # one-hot row selection).
    fused = params["embedding"].astype(jnp.float32) @ wih + b_cat           # (V, 8H)
    fused = jnp.pad(fused, ((0, VP - V), (0, 0)))
    slab1 = jnp.concatenate([fused, whh], axis=0)                           # (VP+2H, 8H)

    w2_row = params["w2"].T                                                 # (1, H)
    b2_row = jnp.broadcast_to(params["b2"], (1, H))
    slab2 = jnp.concatenate(
        [params["w1"], params["b1"], w2_row, b2_row], axis=0)               # (2H+3, H)

    pc = prev_chars.astype(jnp.int32)
    if BP > B:
        pc = jnp.pad(pc, ((0, BP - B), (0, 0)))
    ids = pc.T.reshape(T * BP, 1)     # time-major rows: row t*BP + b = token (b, t)

    vmem = pl.BlockSpec(memory_space=pltpu.MemorySpace.VMEM)
    out = pl.pallas_call(
        discriminator_kernel,
        out_shape=jax.ShapeDtypeStruct((BP, 1), jnp.float32),
        in_specs=[vmem, vmem, vmem],
        out_specs=vmem,
    )(ids, slab1, slab2)
    return out[:B]


def make_params(key, vocab_size, embedding_dim, hidden_dim):
    ks = jax.random.split(key, 12)
    E, H = embedding_dim, hidden_dim
    s = 0.1
    p = {
        "embedding": jax.random.normal(ks[0], (vocab_size, E), jnp.float32) * s,
        # LSTM weights stored already transposed to (in, out) for the kernel.
        "wih_f": jax.random.normal(ks[1], (E, 4 * H), jnp.float32) * s,
        "whh_f": jax.random.normal(ks[2], (H, 4 * H), jnp.float32) * s,
        # combined bias (bias_ih + bias_hh), kept 2D for TPU layout friendliness
        "b_f": jax.random.normal(ks[3], (1, 4 * H), jnp.float32) * s,
        "wih_b": jax.random.normal(ks[4], (E, 4 * H), jnp.float32) * s,
        "whh_b": jax.random.normal(ks[5], (H, 4 * H), jnp.float32) * s,
        "b_b": jax.random.normal(ks[6], (1, 4 * H), jnp.float32) * s,
        # fc1: (2H -> H), fc2: (H -> 1); stored as (in, out)
        "w1": jax.random.normal(ks[7], (2 * H, H), jnp.float32) * s,
        "b1": jax.random.normal(ks[8], (1, H), jnp.float32) * s,
        "w2": jax.random.normal(ks[9], (H, 1), jnp.float32) * s,
        "b2": jax.random.normal(ks[10], (1, 1), jnp.float32) * s,
    }
    return p


def reference_forward(prev_chars, p):
    """Pure-JAX reference mirroring the PyTorch forward (eval mode)."""
    emb = jnp.take(p["embedding"], prev_chars, axis=0).astype(jnp.float32)
    B, T, _ = emb.shape
    H = p["whh_f"].shape[0]

    def run_dir(wih, whh, b, reverse):
        def step(carry, x_t):
            h, c = carry
            gates = x_t @ wih + h @ whh + b
            i_g = jax.nn.sigmoid(gates[:, 0:H])
            f_g = jax.nn.sigmoid(gates[:, H:2 * H])
            g_g = jnp.tanh(gates[:, 2 * H:3 * H])
            o_g = jax.nn.sigmoid(gates[:, 3 * H:4 * H])
            c_new = f_g * c + i_g * g_g
            h_new = o_g * jnp.tanh(c_new)
            return (h_new, c_new), h_new

        xs = jnp.transpose(emb, (1, 0, 2))  # (T, B, E)
        if reverse:
            xs = xs[::-1]
        (_, _), hs = lax.scan(step, (jnp.zeros((B, H)), jnp.zeros((B, H))), xs)
        if reverse:
            hs = hs[::-1]
        return hs  # (T, B, H)

    hf = run_dir(p["wih_f"], p["whh_f"], p["b_f"], False)
    hb = run_dir(p["wih_b"], p["whh_b"], p["b_b"], True)
    lstm_out = jnp.concatenate([hf, hb], axis=-1)          # (T, B, 2H)
    pooled = jnp.max(lstm_out, axis=0)                     # (B, 2H)
    x = jnp.maximum(pooled @ p["w1"] + p["b1"], 0.0)
    return jax.nn.sigmoid(x @ p["w2"] + p["b2"])


if __name__ == "__main__":
    key = jax.random.PRNGKey(0)
    vocab_size, embedding_dim, hidden_dim = 20, 16, 32
    B, T = 2, 8

    kp, kx = jax.random.split(key)
    params = make_params(kp, vocab_size, embedding_dim, hidden_dim)
    prev_chars = jax.random.randint(kx, (B, T), 0, vocab_size, dtype=jnp.int32)

    out = discriminator_forward(prev_chars, params)
    out = jax.block_until_ready(out)

    ref = jax.block_until_ready(reference_forward(prev_chars, params))
    assert out.shape == (B, 1)
    assert jnp.allclose(out, ref, rtol=3e-3, atol=3e-3), (out, ref)

    print("KERNEL_OK")
</pallas_src>

<mosaic_0001>
module attributes {stable_mosaic.version = 11 : i64} {
  func.func @discriminator_kernel(%arg0: memref<64x1xi32, #tpu.memory_space<vmem>>, %arg1: memref<88x256xf32, #tpu.memory_space<vmem>>, %arg2: memref<67x32xf32, #tpu.memory_space<vmem>>, %arg3: memref<8x1xf32, #tpu.memory_space<vmem>>) attributes {dimension_semantics = [], scalar_prefetch = 0 : i64, scratch_operands = 0 : i64, tpu.core_type = #tpu.core_type<tc>} {
    %c0 = arith.constant 0 : index
    %c0_0 = arith.constant 0 : index
    %0 = vector.load %arg0[%c0, %c0_0] : memref<64x1xi32, #tpu.memory_space<vmem>>, vector<64x1xi32>
    %1 = tpu.iota {dimensions = array<i32: 1>} : vector<64x24xi32>
    %2 = vector.broadcast %0 : vector<64x1xi32> to vector<64x24xi32>
    %3 = arith.cmpi eq, %1, %2 : vector<64x24xi32>
    %4 = arith.extui %3 : vector<64x24xi1> to vector<64x24xi32>
    %5 = arith.sitofp %4 : vector<64x24xi32> to vector<64x24xf32>
    %c0_1 = arith.constant 0 : index
    %c0_2 = arith.constant 0 : index
    %6 = vector.load %arg1[%c0_1, %c0_2] : memref<88x256xf32, #tpu.memory_space<vmem>>, vector<24x256xf32>
    %cst = arith.constant dense<0.000000e+00> : vector<64x256xf32>
    %7 = tpu.matmul %5, %6, %cst {dimension_numbers = #tpu.dot_dimension_numbers<[1], [0], [0], [1], [0, 0, 1, 1], [], []>} : vector<64x24xf32>, vector<24x256xf32>, vector<64x256xf32> -> vector<64x256xf32>
    %8 = tpu.iota {dimensions = array<i32: 1>} : vector<8x256xi32>
    %c64_i32 = arith.constant 64 : i32
    %c0_i32 = arith.constant 0 : i32
    %9 = arith.cmpi eq, %c64_i32, %c0_i32 : i32
    %c1_i32 = arith.constant 1 : i32
    %10 = arith.select %9, %c1_i32, %c64_i32 : i32
    %11 = vector.broadcast %10 : i32 to vector<8x256xi32>
    %12 = arith.remsi %8, %11 : vector<8x256xi32>
    %c0_i32_3 = arith.constant 0 : i32
    %13 = vector.broadcast %c0_i32_3 : i32 to vector<8x256xi32>
    %14 = arith.cmpi ne, %12, %13 : vector<8x256xi32>
    %c0_i32_4 = arith.constant 0 : i32
    %15 = vector.broadcast %c0_i32_4 : i32 to vector<8x256xi32>
    %16 = arith.cmpi slt, %12, %15 : vector<8x256xi32>
    %c0_i32_5 = arith.constant 0 : i32
    %17 = arith.cmpi slt, %10, %c0_i32_5 : i32
    %18 = vector.broadcast %17 : i1 to vector<8x256xi1>
    %19 = vector.broadcast %18 : vector<8x256xi1> to vector<8x256xi1>
    %20 = arith.xori %16, %19 : vector<8x256xi1>
    %21 = arith.andi %20, %14 : vector<8x256xi1>
    %22 = vector.broadcast %10 : i32 to vector<8x256xi32>
    %23 = arith.addi %12, %22 : vector<8x256xi32>
    %24 = arith.select %21, %23, %12 : vector<8x256xi1>, vector<8x256xi32>
    %c32_i32 = arith.constant 32 : i32
    %25 = vector.broadcast %c32_i32 : i32 to vector<8x256xi32>
    %26 = arith.cmpi slt, %24, %25 : vector<8x256xi32>
    %c128_i32 = arith.constant 128 : i32
    %27 = vector.broadcast %c128_i32 : i32 to vector<8x256xi32>
    %28 = arith.cmpi sge, %8, %27 : vector<8x256xi32>
    %c192_i32 = arith.constant 192 : i32
    %29 = vector.broadcast %c192_i32 : i32 to vector<8x256xi32>
    %30 = arith.cmpi slt, %8, %29 : vector<8x256xi32>
    %31 = arith.andi %28, %30 : vector<8x256xi1>
    %cst_6 = arith.constant 2.000000e+00 : f32
    %cst_7 = arith.constant 1.000000e+00 : f32
    %32 = vector.broadcast %cst_6 : f32 to vector<8x256xf32>
    %33 = vector.broadcast %cst_7 : f32 to vector<8x256xf32>
    %34 = arith.select %31, %32, %33 : vector<8x256xi1>, vector<8x256xf32>
    %cst_8 = arith.constant 1.000000e+00 : f32
    %cst_9 = arith.constant 0.000000e+00 : f32
    %35 = vector.broadcast %cst_8 : f32 to vector<8x256xf32>
    %36 = vector.broadcast %cst_9 : f32 to vector<8x256xf32>
    %37 = arith.select %31, %35, %36 : vector<8x256xi1>, vector<8x256xf32>
    %38 = vector.extract_strided_slice %7 {offsets = [0, 0], sizes = [8, 256], strides = [1, 1]} : vector<64x256xf32> to vector<8x256xf32>
    %39 = vector.extract_strided_slice %7 {offsets = [56, 0], sizes = [8, 256], strides = [1, 1]} : vector<64x256xf32> to vector<8x256xf32>
    %40 = arith.select %26, %38, %39 : vector<8x256xi1>, vector<8x256xf32>
    %41 = vector.extract_strided_slice %7 {offsets = [8, 0], sizes = [8, 256], strides = [1, 1]} : vector<64x256xf32> to vector<8x256xf32>
    %42 = vector.extract_strided_slice %7 {offsets = [48, 0], sizes = [8, 256], strides = [1, 1]} : vector<64x256xf32> to vector<8x256xf32>
    %43 = arith.select %26, %41, %42 : vector<8x256xi1>, vector<8x256xf32>
    %44 = vector.extract_strided_slice %7 {offsets = [16, 0], sizes = [8, 256], strides = [1, 1]} : vector<64x256xf32> to vector<8x256xf32>
    %45 = vector.extract_strided_slice %7 {offsets = [40, 0], sizes = [8, 256], strides = [1, 1]} : vector<64x256xf32> to vector<8x256xf32>
    %46 = arith.select %26, %44, %45 : vector<8x256xi1>, vector<8x256xf32>
    %47 = vector.extract_strided_slice %7 {offsets = [24, 0], sizes = [8, 256], strides = [1, 1]} : vector<64x256xf32> to vector<8x256xf32>
    %48 = vector.extract_strided_slice %7 {offsets = [32, 0], sizes = [8, 256], strides = [1, 1]} : vector<64x256xf32> to vector<8x256xf32>
    %49 = arith.select %26, %47, %48 : vector<8x256xi1>, vector<8x256xf32>
    %50 = vector.extract_strided_slice %7 {offsets = [32, 0], sizes = [8, 256], strides = [1, 1]} : vector<64x256xf32> to vector<8x256xf32>
    %51 = vector.extract_strided_slice %7 {offsets = [24, 0], sizes = [8, 256], strides = [1, 1]} : vector<64x256xf32> to vector<8x256xf32>
    %52 = arith.select %26, %50, %51 : vector<8x256xi1>, vector<8x256xf32>
    %53 = vector.extract_strided_slice %7 {offsets = [40, 0], sizes = [8, 256], strides = [1, 1]} : vector<64x256xf32> to vector<8x256xf32>
    %54 = vector.extract_strided_slice %7 {offsets = [16, 0], sizes = [8, 256], strides = [1, 1]} : vector<64x256xf32> to vector<8x256xf32>
    %55 = arith.select %26, %53, %54 : vector<8x256xi1>, vector<8x256xf32>
    %56 = vector.extract_strided_slice %7 {offsets = [48, 0], sizes = [8, 256], strides = [1, 1]} : vector<64x256xf32> to vector<8x256xf32>
    %57 = vector.extract_strided_slice %7 {offsets = [8, 0], sizes = [8, 256], strides = [1, 1]} : vector<64x256xf32> to vector<8x256xf32>
    %58 = arith.select %26, %56, %57 : vector<8x256xi1>, vector<8x256xf32>
    %59 = vector.extract_strided_slice %7 {offsets = [56, 0], sizes = [8, 256], strides = [1, 1]} : vector<64x256xf32> to vector<8x256xf32>
    %60 = vector.extract_strided_slice %7 {offsets = [0, 0], sizes = [8, 256], strides = [1, 1]} : vector<64x256xf32> to vector<8x256xf32>
    %61 = arith.select %26, %59, %60 : vector<8x256xi1>, vector<8x256xf32>
    %c24 = arith.constant 24 : index
    %c0_10 = arith.constant 0 : index
    %62 = vector.load %arg1[%c24, %c0_10] : memref<88x256xf32, #tpu.memory_space<vmem>>, vector<64x256xf32>
    %cst_11 = arith.constant 0.000000e+00 : f32
    %63 = vector.broadcast %cst_11 : f32 to vector<8x64xf32>
    %cst_12 = arith.constant 0.000000e+00 : f32
    %64 = vector.broadcast %cst_12 : f32 to vector<8x64xf32>
    %cst_13 = arith.constant 0xFF800000 : f32
    %65 = vector.broadcast %cst_13 : f32 to vector<8x64xf32>
    %cst_14 = arith.constant dense<0.000000e+00> : vector<8x256xf32>
    %66 = tpu.matmul %63, %62, %cst_14 {dimension_numbers = #tpu.dot_dimension_numbers<[1], [0], [0], [1], [0, 0, 1, 1], [], []>} : vector<8x64xf32>, vector<64x256xf32>, vector<8x256xf32> -> vector<8x256xf32>
    %67 = arith.addf %40, %66 : vector<8x256xf32>
    %68 = arith.mulf %67, %34 : vector<8x256xf32>
    %69 = arith.negf %68 : vector<8x256xf32>
    %70 = math.exp %69 : vector<8x256xf32>
    %cst_15 = arith.constant 1.000000e+00 : f32
    %71 = vector.broadcast %cst_15 : f32 to vector<8x256xf32>
    %72 = arith.addf %71, %70 : vector<8x256xf32>
    %73 = arith.divf %71, %72 : vector<8x256xf32>
    %74 = arith.mulf %73, %34 : vector<8x256xf32>
    %75 = arith.subf %74, %37 : vector<8x256xf32>
    %76 = vector.extract_strided_slice %75 {offsets = [0, 0], sizes = [8, 64], strides = [1, 1]} : vector<8x256xf32> to vector<8x64xf32>
    %77 = vector.extract_strided_slice %75 {offsets = [0, 64], sizes = [8, 64], strides = [1, 1]} : vector<8x256xf32> to vector<8x64xf32>
    %78 = vector.extract_strided_slice %75 {offsets = [0, 128], sizes = [8, 64], strides = [1, 1]} : vector<8x256xf32> to vector<8x64xf32>
    %79 = vector.extract_strided_slice %75 {offsets = [0, 192], sizes = [8, 64], strides = [1, 1]} : vector<8x256xf32> to vector<8x64xf32>
    %80 = arith.mulf %77, %64 : vector<8x64xf32>
    %81 = arith.mulf %76, %78 : vector<8x64xf32>
    %82 = arith.addf %80, %81 : vector<8x64xf32>
    %83 = math.tanh %82 : vector<8x64xf32>
    %84 = arith.mulf %79, %83 : vector<8x64xf32>
    %85 = arith.maximumf %65, %84 : vector<8x64xf32>
    %cst_16 = arith.constant dense<0.000000e+00> : vector<8x256xf32>
    %86 = tpu.matmul %84, %62, %cst_16 {dimension_numbers = #tpu.dot_dimension_numbers<[1], [0], [0], [1], [0, 0, 1, 1], [], []>} : vector<8x64xf32>, vector<64x256xf32>, vector<8x256xf32> -> vector<8x256xf32>
    %87 = arith.addf %43, %86 : vector<8x256xf32>
    %88 = arith.mulf %87, %34 : vector<8x256xf32>
    %89 = arith.negf %88 : vector<8x256xf32>
    %90 = math.exp %89 : vector<8x256xf32>
    %cst_17 = arith.constant 1.000000e+00 : f32
    %91 = vector.broadcast %cst_17 : f32 to vector<8x256xf32>
    %92 = arith.addf %91, %90 : vector<8x256xf32>
    %93 = arith.divf %91, %92 : vector<8x256xf32>
    %94 = arith.mulf %93, %34 : vector<8x256xf32>
    %95 = arith.subf %94, %37 : vector<8x256xf32>
    %96 = vector.extract_strided_slice %95 {offsets = [0, 0], sizes = [8, 64], strides = [1, 1]} : vector<8x256xf32> to vector<8x64xf32>
    %97 = vector.extract_strided_slice %95 {offsets = [0, 64], sizes = [8, 64], strides = [1, 1]} : vector<8x256xf32> to vector<8x64xf32>
    %98 = vector.extract_strided_slice %95 {offsets = [0, 128], sizes = [8, 64], strides = [1, 1]} : vector<8x256xf32> to vector<8x64xf32>
    %99 = vector.extract_strided_slice %95 {offsets = [0, 192], sizes = [8, 64], strides = [1, 1]} : vector<8x256xf32> to vector<8x64xf32>
    %100 = arith.mulf %97, %82 : vector<8x64xf32>
    %101 = arith.mulf %96, %98 : vector<8x64xf32>
    %102 = arith.addf %100, %101 : vector<8x64xf32>
    %103 = math.tanh %102 : vector<8x64xf32>
    %104 = arith.mulf %99, %103 : vector<8x64xf32>
    %105 = arith.maximumf %85, %104 : vector<8x64xf32>
    %cst_18 = arith.constant dense<0.000000e+00> : vector<8x256xf32>
    %106 = tpu.matmul %104, %62, %cst_18 {dimension_numbers = #tpu.dot_dimension_numbers<[1], [0], [0], [1], [0, 0, 1, 1], [], []>} : vector<8x64xf32>, vector<64x256xf32>, vector<8x256xf32> -> vector<8x256xf32>
    %107 = arith.addf %46, %106 : vector<8x256xf32>
    %108 = arith.mulf %107, %34 : vector<8x256xf32>
    %109 = arith.negf %108 : vector<8x256xf32>
    %110 = math.exp %109 : vector<8x256xf32>
    %cst_19 = arith.constant 1.000000e+00 : f32
    %111 = vector.broadcast %cst_19 : f32 to vector<8x256xf32>
    %112 = arith.addf %111, %110 : vector<8x256xf32>
    %113 = arith.divf %111, %112 : vector<8x256xf32>
    %114 = arith.mulf %113, %34 : vector<8x256xf32>
    %115 = arith.subf %114, %37 : vector<8x256xf32>
    %116 = vector.extract_strided_slice %115 {offsets = [0, 0], sizes = [8, 64], strides = [1, 1]} : vector<8x256xf32> to vector<8x64xf32>
    %117 = vector.extract_strided_slice %115 {offsets = [0, 64], sizes = [8, 64], strides = [1, 1]} : vector<8x256xf32> to vector<8x64xf32>
    %118 = vector.extract_strided_slice %115 {offsets = [0, 128], sizes = [8, 64], strides = [1, 1]} : vector<8x256xf32> to vector<8x64xf32>
    %119 = vector.extract_strided_slice %115 {offsets = [0, 192], sizes = [8, 64], strides = [1, 1]} : vector<8x256xf32> to vector<8x64xf32>
    %120 = arith.mulf %117, %102 : vector<8x64xf32>
    %121 = arith.mulf %116, %118 : vector<8x64xf32>
    %122 = arith.addf %120, %121 : vector<8x64xf32>
    %123 = math.tanh %122 : vector<8x64xf32>
    %124 = arith.mulf %119, %123 : vector<8x64xf32>
    %125 = arith.maximumf %105, %124 : vector<8x64xf32>
    %cst_20 = arith.constant dense<0.000000e+00> : vector<8x256xf32>
    %126 = tpu.matmul %124, %62, %cst_20 {dimension_numbers = #tpu.dot_dimension_numbers<[1], [0], [0], [1], [0, 0, 1, 1], [], []>} : vector<8x64xf32>, vector<64x256xf32>, vector<8x256xf32> -> vector<8x256xf32>
    %127 = arith.addf %49, %126 : vector<8x256xf32>
    %128 = arith.mulf %127, %34 : vector<8x256xf32>
    %129 = arith.negf %128 : vector<8x256xf32>
    %130 = math.exp %129 : vector<8x256xf32>
    %cst_21 = arith.constant 1.000000e+00 : f32
    %131 = vector.broadcast %cst_21 : f32 to vector<8x256xf32>
    %132 = arith.addf %131, %130 : vector<8x256xf32>
    %133 = arith.divf %131, %132 : vector<8x256xf32>
    %134 = arith.mulf %133, %34 : vector<8x256xf32>
    %135 = arith.subf %134, %37 : vector<8x256xf32>
    %136 = vector.extract_strided_slice %135 {offsets = [0, 0], sizes = [8, 64], strides = [1, 1]} : vector<8x256xf32> to vector<8x64xf32>
    %137 = vector.extract_strided_slice %135 {offsets = [0, 64], sizes = [8, 64], strides = [1, 1]} : vector<8x256xf32> to vector<8x64xf32>
    %138 = vector.extract_strided_slice %135 {offsets = [0, 128], sizes = [8, 64], strides = [1, 1]} : vector<8x256xf32> to vector<8x64xf32>
    %139 = vector.extract_strided_slice %135 {offsets = [0, 192], sizes = [8, 64], strides = [1, 1]} : vector<8x256xf32> to vector<8x64xf32>
    %140 = arith.mulf %137, %122 : vector<8x64xf32>
    %141 = arith.mulf %136, %138 : vector<8x64xf32>
    %142 = arith.addf %140, %141 : vector<8x64xf32>
    %143 = math.tanh %142 : vector<8x64xf32>
    %144 = arith.mulf %139, %143 : vector<8x64xf32>
    %145 = arith.maximumf %125, %144 : vector<8x64xf32>
    %cst_22 = arith.constant dense<0.000000e+00> : vector<8x256xf32>
    %146 = tpu.matmul %144, %62, %cst_22 {dimension_numbers = #tpu.dot_dimension_numbers<[1], [0], [0], [1], [0, 0, 1, 1], [], []>} : vector<8x64xf32>, vector<64x256xf32>, vector<8x256xf32> -> vector<8x256xf32>
    %147 = arith.addf %52, %146 : vector<8x256xf32>
    %148 = arith.mulf %147, %34 : vector<8x256xf32>
    %149 = arith.negf %148 : vector<8x256xf32>
    %150 = math.exp %149 : vector<8x256xf32>
    %cst_23 = arith.constant 1.000000e+00 : f32
    %151 = vector.broadcast %cst_23 : f32 to vector<8x256xf32>
    %152 = arith.addf %151, %150 : vector<8x256xf32>
    %153 = arith.divf %151, %152 : vector<8x256xf32>
    %154 = arith.mulf %153, %34 : vector<8x256xf32>
    %155 = arith.subf %154, %37 : vector<8x256xf32>
    %156 = vector.extract_strided_slice %155 {offsets = [0, 0], sizes = [8, 64], strides = [1, 1]} : vector<8x256xf32> to vector<8x64xf32>
    %157 = vector.extract_strided_slice %155 {offsets = [0, 64], sizes = [8, 64], strides = [1, 1]} : vector<8x256xf32> to vector<8x64xf32>
    %158 = vector.extract_strided_slice %155 {offsets = [0, 128], sizes = [8, 64], strides = [1, 1]} : vector<8x256xf32> to vector<8x64xf32>
    %159 = vector.extract_strided_slice %155 {offsets = [0, 192], sizes = [8, 64], strides = [1, 1]} : vector<8x256xf32> to vector<8x64xf32>
    %160 = arith.mulf %157, %142 : vector<8x64xf32>
    %161 = arith.mulf %156, %158 : vector<8x64xf32>
    %162 = arith.addf %160, %161 : vector<8x64xf32>
    %163 = math.tanh %162 : vector<8x64xf32>
    %164 = arith.mulf %159, %163 : vector<8x64xf32>
    %165 = arith.maximumf %145, %164 : vector<8x64xf32>
    %cst_24 = arith.constant dense<0.000000e+00> : vector<8x256xf32>
    %166 = tpu.matmul %164, %62, %cst_24 {dimension_numbers = #tpu.dot_dimension_numbers<[1], [0], [0], [1], [0, 0, 1, 1], [], []>} : vector<8x64xf32>, vector<64x256xf32>, vector<8x256xf32> -> vector<8x256xf32>
    %167 = arith.addf %55, %166 : vector<8x256xf32>
    %168 = arith.mulf %167, %34 : vector<8x256xf32>
    %169 = arith.negf %168 : vector<8x256xf32>
    %170 = math.exp %169 : vector<8x256xf32>
    %cst_25 = arith.constant 1.000000e+00 : f32
    %171 = vector.broadcast %cst_25 : f32 to vector<8x256xf32>
    %172 = arith.addf %171, %170 : vector<8x256xf32>
    %173 = arith.divf %171, %172 : vector<8x256xf32>
    %174 = arith.mulf %173, %34 : vector<8x256xf32>
    %175 = arith.subf %174, %37 : vector<8x256xf32>
    %176 = vector.extract_strided_slice %175 {offsets = [0, 0], sizes = [8, 64], strides = [1, 1]} : vector<8x256xf32> to vector<8x64xf32>
    %177 = vector.extract_strided_slice %175 {offsets = [0, 64], sizes = [8, 64], strides = [1, 1]} : vector<8x256xf32> to vector<8x64xf32>
    %178 = vector.extract_strided_slice %175 {offsets = [0, 128], sizes = [8, 64], strides = [1, 1]} : vector<8x256xf32> to vector<8x64xf32>
    %179 = vector.extract_strided_slice %175 {offsets = [0, 192], sizes = [8, 64], strides = [1, 1]} : vector<8x256xf32> to vector<8x64xf32>
    %180 = arith.mulf %177, %162 : vector<8x64xf32>
    %181 = arith.mulf %176, %178 : vector<8x64xf32>
    %182 = arith.addf %180, %181 : vector<8x64xf32>
    %183 = math.tanh %182 : vector<8x64xf32>
    %184 = arith.mulf %179, %183 : vector<8x64xf32>
    %185 = arith.maximumf %165, %184 : vector<8x64xf32>
    %cst_26 = arith.constant dense<0.000000e+00> : vector<8x256xf32>
    %186 = tpu.matmul %184, %62, %cst_26 {dimension_numbers = #tpu.dot_dimension_numbers<[1], [0], [0], [1], [0, 0, 1, 1], [], []>} : vector<8x64xf32>, vector<64x256xf32>, vector<8x256xf32> -> vector<8x256xf32>
    %187 = arith.addf %58, %186 : vector<8x256xf32>
    %188 = arith.mulf %187, %34 : vector<8x256xf32>
    %189 = arith.negf %188 : vector<8x256xf32>
    %190 = math.exp %189 : vector<8x256xf32>
    %cst_27 = arith.constant 1.000000e+00 : f32
    %191 = vector.broadcast %cst_27 : f32 to vector<8x256xf32>
    %192 = arith.addf %191, %190 : vector<8x256xf32>
    %193 = arith.divf %191, %192 : vector<8x256xf32>
    %194 = arith.mulf %193, %34 : vector<8x256xf32>
    %195 = arith.subf %194, %37 : vector<8x256xf32>
    %196 = vector.extract_strided_slice %195 {offsets = [0, 0], sizes = [8, 64], strides = [1, 1]} : vector<8x256xf32> to vector<8x64xf32>
    %197 = vector.extract_strided_slice %195 {offsets = [0, 64], sizes = [8, 64], strides = [1, 1]} : vector<8x256xf32> to vector<8x64xf32>
    %198 = vector.extract_strided_slice %195 {offsets = [0, 128], sizes = [8, 64], strides = [1, 1]} : vector<8x256xf32> to vector<8x64xf32>
    %199 = vector.extract_strided_slice %195 {offsets = [0, 192], sizes = [8, 64], strides = [1, 1]} : vector<8x256xf32> to vector<8x64xf32>
    %200 = arith.mulf %197, %182 : vector<8x64xf32>
    %201 = arith.mulf %196, %198 : vector<8x64xf32>
    %202 = arith.addf %200, %201 : vector<8x64xf32>
    %203 = math.tanh %202 : vector<8x64xf32>
    %204 = arith.mulf %199, %203 : vector<8x64xf32>
    %205 = arith.maximumf %185, %204 : vector<8x64xf32>
    %cst_28 = arith.constant dense<0.000000e+00> : vector<8x256xf32>
    %206 = tpu.matmul %204, %62, %cst_28 {dimension_numbers = #tpu.dot_dimension_numbers<[1], [0], [0], [1], [0, 0, 1, 1], [], []>} : vector<8x64xf32>, vector<64x256xf32>, vector<8x256xf32> -> vector<8x256xf32>
    %207 = arith.addf %61, %206 : vector<8x256xf32>
    %208 = arith.mulf %207, %34 : vector<8x256xf32>
    %209 = arith.negf %208 : vector<8x256xf32>
    %210 = math.exp %209 : vector<8x256xf32>
    %cst_29 = arith.constant 1.000000e+00 : f32
    %211 = vector.broadcast %cst_29 : f32 to vector<8x256xf32>
    %212 = arith.addf %211, %210 : vector<8x256xf32>
    %213 = arith.divf %211, %212 : vector<8x256xf32>
    %214 = arith.mulf %213, %34 : vector<8x256xf32>
    %215 = arith.subf %214, %37 : vector<8x256xf32>
    %216 = vector.extract_strided_slice %215 {offsets = [0, 0], sizes = [8, 64], strides = [1, 1]} : vector<8x256xf32> to vector<8x64xf32>
    %217 = vector.extract_strided_slice %215 {offsets = [0, 64], sizes = [8, 64], strides = [1, 1]} : vector<8x256xf32> to vector<8x64xf32>
    %218 = vector.extract_strided_slice %215 {offsets = [0, 128], sizes = [8, 64], strides = [1, 1]} : vector<8x256xf32> to vector<8x64xf32>
    %219 = vector.extract_strided_slice %215 {offsets = [0, 192], sizes = [8, 64], strides = [1, 1]} : vector<8x256xf32> to vector<8x64xf32>
    %220 = arith.mulf %217, %202 : vector<8x64xf32>
    %221 = arith.mulf %216, %218 : vector<8x64xf32>
    %222 = arith.addf %220, %221 : vector<8x64xf32>
    %223 = math.tanh %222 : vector<8x64xf32>
    %224 = arith.mulf %219, %223 : vector<8x64xf32>
    %225 = arith.maximumf %205, %224 : vector<8x64xf32>
    %c0_30 = arith.constant 0 : index
    %c0_31 = arith.constant 0 : index
    %226 = vector.load %arg2[%c0_30, %c0_31] : memref<67x32xf32, #tpu.memory_space<vmem>>, vector<64x32xf32>
    %c64 = arith.constant 64 : index
    %c0_32 = arith.constant 0 : index
    %227 = vector.load %arg2[%c64, %c0_32] : memref<67x32xf32, #tpu.memory_space<vmem>>, vector<1x32xf32>
    %c65 = arith.constant 65 : index
    %c0_33 = arith.constant 0 : index
    %228 = vector.load %arg2[%c65, %c0_33] : memref<67x32xf32, #tpu.memory_space<vmem>>, vector<1x32xf32>
    %c66 = arith.constant 66 : index
    %c0_34 = arith.constant 0 : index
    %229 = vector.load %arg2[%c66, %c0_34] : memref<67x32xf32, #tpu.memory_space<vmem>>, vector<1x1xf32>
    %cst_35 = arith.constant dense<0.000000e+00> : vector<8x32xf32>
    %230 = tpu.matmul %225, %226, %cst_35 {dimension_numbers = #tpu.dot_dimension_numbers<[1], [0], [0], [1], [0, 0, 1, 1], [], []>} : vector<8x64xf32>, vector<64x32xf32>, vector<8x32xf32> -> vector<8x32xf32>
    %231 = vector.broadcast %227 : vector<1x32xf32> to vector<8x32xf32>
    %232 = arith.addf %230, %231 : vector<8x32xf32>
    %cst_36 = arith.constant 0.000000e+00 : f32
    %233 = vector.broadcast %cst_36 : f32 to vector<8x32xf32>
    %234 = arith.maximumf %232, %233 : vector<8x32xf32>
    %235 = vector.broadcast %228 : vector<1x32xf32> to vector<8x32xf32>
    %236 = arith.mulf %234, %235 : vector<8x32xf32>
    %cst_37 = arith.constant dense<0.000000e+00> : vector<8xf32>
    %237 = vector.multi_reduction <add>, %236, %cst_37 [1] : vector<8x32xf32> to vector<8xf32>
    %238 = vector.shape_cast %237 : vector<8xf32> to vector<8x1xf32>
    %239 = vector.broadcast %229 : vector<1x1xf32> to vector<8x1xf32>
    %240 = arith.addf %238, %239 : vector<8x1xf32>
    %241 = arith.negf %240 : vector<8x1xf32>
    %242 = math.exp %241 : vector<8x1xf32>
    %cst_38 = arith.constant 1.000000e+00 : f32
    %243 = vector.broadcast %cst_38 : f32 to vector<8x1xf32>
    %244 = arith.addf %243, %242 : vector<8x1xf32>
    %245 = arith.divf %243, %244 : vector<8x1xf32>
    %c0_39 = arith.constant 0 : index
    %c0_40 = arith.constant 0 : index
    %246 = vector.load %arg3[%c0_39, %c0_40] : memref<8x1xf32, #tpu.memory_space<vmem>>, vector<8x1xf32>
    tpu.vector_store %arg3[%c0_39, %c0_40], %245 {strides = array<i32>} : memref<8x1xf32, #tpu.memory_space<vmem>>, vector<8x1xf32>,
    return
  }
}

</mosaic_0001>

<llo_original>
// kernel: tpu_custom_call.1
$region0: #{tpu_custom_call.1}
  #allocation0 [shape = 'u32[]', space=smem, size = 0x4, offset = 0x4, fixed_abs, tag = 'smem constant byte address 0x4 - core index']
  #allocation1 [shape = 'u32[144,128]{1,0:T(1,128)}', space=vmem, size = 0x12000, scoped, tag = 'internal scratch']
  %s0 = inlined_call_operand.vmem [shape: s32[64,1], index: 0, kind: input, shape index: {}]
  %s1 = inlined_call_operand.hbm [shape: f32[88,256], index: 1, kind: input, shape index: {}]
  %s2 = inlined_call_operand.vmem [shape: f32[67,32], index: 2, kind: input, shape index: {}]
  %s3 = inlined_call_operand.vmem [shape: f32[8,1], index: 3, kind: output, shape index: {}]
  %s4 = sld [smem:[#allocation0]]
  $region26: #{tpu_custom_call.1} parent=0
    _
  %s6 = ssub.s32 1, %s4
  %s7 = scalar_select 0, %s6, %s4
  $region1: #{tpu_custom_call.1} parent=0
    #allocation2 [shape = 'u8[90112]{0}', space=vmem, size = 0x16000, scoped, tag = 'input window, operand 1, single buffered']
    #allocation3 [shape = 's32[1]{0}', space=sflag, size = 0x4, scoped, tag = 'scoped memory for tpu_custom_call.1']
    %8 = vsyncpa [#allocation3], 0
    // Predicated region
    $region2: #{tpu_custom_call.1} parent=1 // pred_check
      _
    $region3: #{tpu_custom_call.1} parent=1 // pred_check_branch
      %10 = sbr.rel (0) target = $region5
    $region4: #{tpu_custom_call.1} parent=1 // pred_region
      _
    $region5: #{tpu_custom_call.1} parent=1 // pred_fallthru
      _
    // Predicated region
    $region6: #{tpu_custom_call.1} parent=1 // pred_check
      _
    $region7: #{tpu_custom_call.1} parent=1 // pred_check_branch
      %12 = sbr.rel (0) target = $region9
    $region8: #{tpu_custom_call.1} parent=1 // pred_region
      %s14 = ssub.s32 2816, 2816
      %15 = vsyncadd [#allocation3], %s14
      %s16 = sshll.u32 [#allocation2], 4
      %s17 = int_to_ptr.vmem [resolvable:$true] %s16
      %22 = dma.hbm_to_vmem [thread:$0]  %s1, 2816, %s17, [#allocation3], 256, 256, 16
    $region9: #{tpu_custom_call.1} parent=1 // pred_fallthru
      _
    // Predicated region
    $region10: #{tpu_custom_call.1} parent=1 // pred_check
      _
    $region11: #{tpu_custom_call.1} parent=1 // pred_check_branch
      %24 = sbr.rel (0) target = $region13
    $region12: #{tpu_custom_call.1} parent=1 // pred_region
      _
    $region13: #{tpu_custom_call.1} parent=1 // pred_fallthru
      _
    // Predicated region
    $region14: #{tpu_custom_call.1} parent=1 // pred_check
      _
    $region15: #{tpu_custom_call.1} parent=1 // pred_check_branch
      %26 = sbr.rel (0) target = $region17
    $region16: #{tpu_custom_call.1} parent=1 // pred_region
      %27 = dma.done [#allocation3], 2816
    $region17: #{tpu_custom_call.1} parent=1 // pred_fallthru
      _
    %v28 = vld [vmem:[%s0] sm:$0xff]
    %v29 = vld [vmem:[%s0 + $0x8] sm:$0xff]
    %v30 = vld [vmem:[%s0 + $0x10] sm:$0xff]
    %v31 = vld [vmem:[%s0 + $0x18] sm:$0xff]
    %v32 = vld [vmem:[%s0 + $0x20] sm:$0xff]
    %v33 = vld [vmem:[%s0 + $0x28] sm:$0xff]
    %v34 = vld [vmem:[%s0 + $0x30] sm:$0xff]
    %v35 = vld [vmem:[%s0 + $0x38] sm:$0xff]
    %v36 = vlaneseq
    %v37 = vand.u32 %v36, 127
    %38 = vset.pattern.permute.xlu0 0
    %39 = vperm.xlu0 %38, %v28
    %v40 = vpop.permute.xlu0 %39
    %41 = vset.pattern.permute.xlu0 0
    %42 = vperm.xlu0 %41, %v29
    %v43 = vpop.permute.xlu0 %42
    %44 = vset.pattern.permute.xlu0 0
    %45 = vperm.xlu0 %44, %v30
    %v46 = vpop.permute.xlu0 %45
    %47 = vset.pattern.permute.xlu0 0
    %48 = vperm.xlu0 %47, %v31
    %v49 = vpop.permute.xlu0 %48
    %50 = vset.pattern.permute.xlu0 0
    %51 = vperm.xlu0 %50, %v32
    %v52 = vpop.permute.xlu0 %51
    %53 = vset.pattern.permute.xlu0 0
    %54 = vperm.xlu0 %53, %v33
    %v55 = vpop.permute.xlu0 %54
    %56 = vset.pattern.permute.xlu0 0
    %57 = vperm.xlu0 %56, %v34
    %v58 = vpop.permute.xlu0 %57
    %59 = vset.pattern.permute.xlu0 0
    %60 = vperm.xlu0 %59, %v35
    %v61 = vpop.permute.xlu0 %60
    %vm62 = vcmp.eq.s32.totalorder %v37, %v40
    %vm63 = vcmp.eq.s32.totalorder %v37, %v43
    %vm64 = vcmp.eq.s32.totalorder %v37, %v46
    %vm65 = vcmp.eq.s32.totalorder %v37, %v49
    %vm66 = vcmp.eq.s32.totalorder %v37, %v52
    %vm67 = vcmp.eq.s32.totalorder %v37, %v55
    %vm68 = vcmp.eq.s32.totalorder %v37, %v58
    %vm69 = vcmp.eq.s32.totalorder %v37, %v61
    %v70 = vsel %vm62, 1, 0
    %v71 = vsel %vm63, 1, 0
    %v72 = vsel %vm64, 1, 0
    %v73 = vsel %vm65, 1, 0
    %v74 = vsel %vm66, 1, 0
    %v75 = vsel %vm67, 1, 0
    %v76 = vsel %vm68, 1, 0
    %v77 = vsel %vm69, 1, 0
    %v78 = vcvt.s32.f32 %v70
    %v79 = vcvt.s32.f32 %v71
    %v80 = vcvt.s32.f32 %v72
    %v81 = vcvt.s32.f32 %v73
    %v82 = vcvt.s32.f32 %v74
    %v83 = vcvt.s32.f32 %v75
    %v84 = vcvt.s32.f32 %v76
    %v85 = vcvt.s32.f32 %v77
    %v86 = vld [vmem:[#allocation2] sm:$0xff]
    %v87 = vld [vmem:[#allocation2 + $0x8] sm:$0xff]
    %v88 = vld [vmem:[#allocation2 + $0x10] sm:$0xff]
    %v89 = vld [vmem:[#allocation2 + $0x18] sm:$0xff]
    %v90 = vld [vmem:[#allocation2 + $0x20] sm:$0xff]
    %v91 = vld [vmem:[#allocation2 + $0x28] sm:$0xff]
    %vm92 = vcmask 195584
    %v94 = vsel %vm92, %v78, 0
    %v97 = vsel %vm92, %v79, 0
    %v100 = vsel %vm92, %v80, 0
    %v103 = vsel %vm92, %v81, 0
    %v106 = vsel %vm92, %v82, 0
    %v109 = vsel %vm92, %v83, 0
    %v112 = vsel %vm92, %v84, 0
    %v115 = vsel %vm92, %v85, 0
    %117 = vmatprep.subr.mxu0 %v87
    %118 = vmatpush1.msra.mxu0 %v86
    %119 = vmatprep.subr.mxu0 %v89
    %120 = vmatpush1.msra.mxu0 %v88
    %121 = vmatprep.subr.mxu0 %v91
    %122 = vmatpush1.msra.mxu0 %v90
    %123 = vmatprep.subr.mxu0 0.0
    %124 = vmatpush1.msra.mxu0 0.0
    %125 = vmatprep.subr.mxu0 0.0
    %126 = vmatpush1.msra.mxu0 0.0
    %127 = vmatprep.subr.mxu0 0.0
    %128 = vmatpush1.msra.mxu0 0.0
    %129 = vmatprep.subr.mxu0 0.0
    %130 = vmatpush1.msra.mxu0 0.0
    %131 = vmatprep.subr.mxu0 0.0
    %132 = vmatpush1.msra.mxu0 0.0
    %133 = vmatprep.subr.mxu0 0.0
    %134 = vmatpush1.msra.mxu0 0.0
    %135 = vmatprep.subr.mxu0 0.0
    %136 = vmatpush1.msra.mxu0 0.0
    %137 = vmatprep.subr.mxu0 0.0
    %138 = vmatpush1.msra.mxu0 0.0
    %139 = vmatprep.subr.mxu0 0.0
    %140 = vmatpush1.msra.mxu0 0.0
    %141 = vmatprep.subr.mxu0 0.0
    %142 = vmatpush1.msra.mxu0 0.0
    %143 = vmatprep.subr.mxu0 0.0
    %144 = vmatpush1.msra.mxu0 0.0
    %145 = vmatprep.subr.mxu0 0.0
    %146 = vmatpush1.msra.mxu0 0.0
    %147 = vmatprep.subr.mxu0 0.0
    %148 = vmatpush1.msra.mxu0 0.0
    %149 = vmatprep.subr.mxu0 0.0
    %150 = vmatpush1.msra.mxu0 0.0
    %151 = vmatprep.subr.mxu0 0.0
    %152 = vmatpush1.msra.mxu0 0.0
    %153 = vmatprep.subr.mxu0 0.0
    %154 = vmatpush1.msra.mxu0 0.0
    %155 = vmatprep.subr.mxu0 0.0
    %156 = vmatpush1.msra.mxu0 0.0
    %157 = vmatprep.subr.mxu0 0.0
    %158 = vmatpush1.msra.mxu0 0.0
    %159 = vmatprep.subr.mxu0 0.0
    %160 = vmatpush1.msra.mxu0 0.0
    %161 = vmatprep.subr.mxu0 0.0
    %162 = vmatpush1.msra.mxu0 0.0
    %163 = vmatprep.subr.mxu0 0.0
    %164 = vmatpush1.msra.mxu0 0.0
    %165 = vmatprep.subr.mxu0 0.0
    %166 = vmatpush1.msra.mxu0 0.0
    %167 = vmatprep.subr.mxu0 0.0
    %168 = vmatpush1.msra.mxu0 0.0
    %169 = vmatprep.subr.mxu0 0.0
    %170 = vmatpush1.msra.mxu0 0.0
    %171 = vmatprep.subr.mxu0 0.0
    %172 = vmatpush1.msra.mxu0 0.0
    %173 = vmatprep.subr.mxu0 0.0
    %174 = vmatpush1.msra.mxu0 0.0
    %175 = vmatprep.subr.mxu0 0.0
    %176 = vmatpush1.msra.mxu0 0.0
    %177 = vmatprep.subr.mxu0 0.0
    %178 = vmatpush1.msra.mxu0 0.0
    %179 = vmatprep.subr.mxu0 0.0
    %180 = vmatpush1.msra.mxu0 0.0
    %181 = vmatprep.mubr.f32.mxu0 0.0
    %182 = vmatmul.mubr.f32.gmra.mrb[0].mxu0 %v94
    %v183 = vpop.f32.mrb[0].mxu0
    %v184 = vadd.f32 0.0, %v183
    %v185 = vpop.f32.mrb[0].mxu0
    %v186 = vadd.f32 0.0, %v185
    %187 = vmatprep.mubr.f32.mxu0 0.0
    %188 = vmatmul.mubr.f32.gmra.mrb[0].mxu0 %v97
    %v189 = vpop.f32.mrb[0].mxu0
    %v190 = vadd.f32 0.0, %v189
    %v191 = vpop.f32.mrb[0].mxu0
    %v192 = vadd.f32 0.0, %v191
    %193 = vmatprep.mubr.f32.mxu0 0.0
    %194 = vmatmul.mubr.f32.gmra.mrb[0].mxu0 %v100
    %v195 = vpop.f32.mrb[0].mxu0
    %v196 = vadd.f32 0.0, %v195
    %v197 = vpop.f32.mrb[0].mxu0
    %v198 = vadd.f32 0.0, %v197
    %199 = vmatprep.mubr.f32.mxu0 0.0
    %200 = vmatmul.mubr.f32.gmra.mrb[0].mxu0 %v103
    %v201 = vpop.f32.mrb[0].mxu0
    %v202 = vadd.f32 0.0, %v201
    %v203 = vpop.f32.mrb[0].mxu0
    %v204 = vadd.f32 0.0, %v203
    %205 = vmatprep.mubr.f32.mxu0 0.0
    %206 = vmatmul.mubr.f32.gmra.mrb[0].mxu0 %v106
    %v207 = vpop.f32.mrb[0].mxu0
    %v208 = vadd.f32 0.0, %v207
    %v209 = vpop.f32.mrb[0].mxu0
    %v210 = vadd.f32 0.0, %v209
    %211 = vmatprep.mubr.f32.mxu0 0.0
    %212 = vmatmul.mubr.f32.gmra.mrb[0].mxu0 %v109
    %v213 = vpop.f32.mrb[0].mxu0
    %v214 = vadd.f32 0.0, %v213
    %v215 = vpop.f32.mrb[0].mxu0
    %v216 = vadd.f32 0.0, %v215
    %217 = vmatprep.mubr.f32.mxu0 0.0
    %218 = vmatmul.mubr.f32.gmra.mrb[0].mxu0 %v112
    %v219 = vpop.f32.mrb[0].mxu0
    %v220 = vadd.f32 0.0, %v219
    %v221 = vpop.f32.mrb[0].mxu0
    %v222 = vadd.f32 0.0, %v221
    %223 = vmatprep.mubr.f32.mxu0 0.0
    %224 = vmatmul.mubr.f32.gmra.mrb[0].mxu0 %v115
    %v225 = vpop.f32.mrb[0].mxu0
    %v226 = vadd.f32 0.0, %v225
    %v227 = vpop.f32.mrb[0].mxu0
    %v228 = vadd.f32 0.0, %v227
    %229 = vdwg.mxu0
    %v230 = vadd.s32 %v37, 128
    %vm231 = vcmp.lt.s32.totalorder %v37, 0
    %v232 = vsub.s32 0, %v37
    %v233 = vsel %vm231, %v232, %v37
    %v234 = vshrl.u32 %v233, 6
    %v235 = vand.u32 %v233, 63
    %v236 = vsub.s32 0, %v235
    %v237 = vsel %vm231, %v236, %v235
    %vm238 = vcmp.lt.s32.totalorder %v230, 0
    %v239 = vsub.s32 0, %v230
    %v240 = vsel %vm238, %v239, %v230
    %v241 = vshrl.u32 %v240, 6
    %v242 = vand.u32 %v240, 63
    %v243 = vsub.s32 0, %v242
    %v244 = vsel %vm238, %v243, %v242
    %vm245 = vcmp.ne.s32.totalorder %v237, 0
    %vm246 = vcmp.ne.s32.totalorder %v244, 0
    %vm247 = vcmp.lt.s32.totalorder %v237, 0
    %vm248 = vcmp.lt.s32.totalorder %v244, 0
    %vm249 = vmand %vm247, %vm245
    %vm250 = vmand %vm248, %vm246
    %v251 = vadd.s32 %v237, 64
    %v252 = vadd.s32 %v244, 64
    %v253 = vsel %vm249, %v251, %v237
    %v254 = vsel %vm250, %v252, %v244
    %vm255 = vcmp.lt.s32.totalorder %v253, 32
    %vm256 = vcmp.lt.s32.totalorder %v254, 32
    %vm257 = vcmp.ge.s32.totalorder %v37, 128
    %vm258 = vcmp.ge.s32.totalorder %v230, 128
    %vm259 = vcmp.lt.s32.totalorder %v37, 192
    %vm260 = vcmp.lt.s32.totalorder %v230, 192
    %vm261 = vmand %vm257, %vm259
    %vm262 = vmand %vm258, %vm260
    %v263 = vsel %vm261, 2.0, 1.0
    %v264 = vsel %vm262, 2.0, 1.0
    %v265 = vsel %vm261, 1.0, 0.0
    %v266 = vsel %vm262, 1.0, 0.0
    %v267 = vsel %vm255, %v184, %v226
    %v268 = vsel %vm256, %v186, %v228
    %v269 = vsel %vm255, %v190, %v220
    %v270 = vsel %vm256, %v192, %v222
    %v271 = vsel %vm255, %v196, %v214
    %v272 = vsel %vm256, %v198, %v216
    %v273 = vsel %vm255, %v202, %v208
    %v274 = vsel %vm256, %v204, %v210
    %v275 = vsel %vm255, %v208, %v202
    %v276 = vsel %vm256, %v210, %v204
    %v277 = vsel %vm255, %v214, %v196
    %v278 = vsel %vm256, %v216, %v198
    %v279 = vsel %vm255, %v220, %v190
    %v280 = vsel %vm256, %v222, %v192
    %v281 = vsel %vm255, %v226, %v184
    %v282 = vsel %vm256, %v228, %v186
    %v283 = vld [vmem:[#allocation2 + $0x30] sm:$0xff]
    %v284 = vld [vmem:[#allocation2 + $0x38] sm:$0xff]
    %v285 = vld [vmem:[#allocation2 + $0x40] sm:$0xff]
    %v286 = vld [vmem:[#allocation2 + $0x48] sm:$0xff]
    %v287 = vld [vmem:[#allocation2 + $0x50] sm:$0xff]
    %v288 = vld [vmem:[#allocation2 + $0x58] sm:$0xff]
    %v289 = vld [vmem:[#allocation2 + $0x60] sm:$0xff]
    %v290 = vld [vmem:[#allocation2 + $0x68] sm:$0xff]
    %v291 = vld [vmem:[#allocation2 + $0x70] sm:$0xff]
    %v292 = vld [vmem:[#allocation2 + $0x78] sm:$0xff]
    %v293 = vld [vmem:[#allocation2 + $0x80] sm:$0xff]
    %v294 = vld [vmem:[#allocation2 + $0x88] sm:$0xff]
    %v295 = vld [vmem:[#allocation2 + $0x90] sm:$0xff]
    %v296 = vld [vmem:[#allocation2 + $0x98] sm:$0xff]
    %v297 = vld [vmem:[#allocation2 + $0xa0] sm:$0xff]
    %v298 = vld [vmem:[#allocation2 + $0xa8] sm:$0xff]
    %vm299 = vcmask 523264
    %v301 = vsel %vm299, 0.0, 0
    %303 = vmatprep.subr.mxu0 %v284
    %304 = vmatpush1.msra.mxu0 %v283
    %305 = vmatprep.subr.mxu0 %v286
    %306 = vmatpush1.msra.mxu0 %v285
    %307 = vmatprep.subr.mxu0 %v288
    %308 = vmatpush1.msra.mxu0 %v287
    %309 = vmatprep.subr.mxu0 %v290
    %310 = vmatpush1.msra.mxu0 %v289
    %311 = vmatprep.subr.mxu0 %v292
    %312 = vmatpush1.msra.mxu0 %v291
    %313 = vmatprep.subr.mxu0 %v294
    %314 = vmatpush1.msra.mxu0 %v293
    %315 = vmatprep.subr.mxu0 %v296
    %316 = vmatpush1.msra.mxu0 %v295
    %317 = vmatprep.subr.mxu0 %v298
    %318 = vmatpush1.msra.mxu0 %v297
    %319 = vmatprep.subr.mxu0 0.0
    %320 = vmatpush1.msra.mxu0 0.0
    %321 = vmatprep.subr.mxu0 0.0
    %322 = vmatpush1.msra.mxu0 0.0
    %323 = vmatprep.subr.mxu0 0.0
    %324 = vmatpush1.msra.mxu0 0.0
    %325 = vmatprep.subr.mxu0 0.0
    %326 = vmatpush1.msra.mxu0 0.0
    %327 = vmatprep.subr.mxu0 0.0
    %328 = vmatpush1.msra.mxu0 0.0
    %329 = vmatprep.subr.mxu0 0.0
    %330 = vmatpush1.msra.mxu0 0.0
    %331 = vmatprep.subr.mxu0 0.0
    %332 = vmatpush1.msra.mxu0 0.0
    %333 = vmatprep.subr.mxu0 0.0
    %334 = vmatpush1.msra.mxu0 0.0
    %335 = vmatprep.subr.mxu0 0.0
    %336 = vmatpush1.msra.mxu0 0.0
    %337 = vmatprep.subr.mxu0 0.0
    %338 = vmatpush1.msra.mxu0 0.0
    %339 = vmatprep.subr.mxu0 0.0
    %340 = vmatpush1.msra.mxu0 0.0
    %341 = vmatprep.subr.mxu0 0.0
    %342 = vmatpush1.msra.mxu0 0.0
    %343 = vmatprep.subr.mxu0 0.0
    %344 = vmatpush1.msra.mxu0 0.0
    %345 = vmatprep.subr.mxu0 0.0
    %346 = vmatpush1.msra.mxu0 0.0
    %347 = vmatprep.subr.mxu0 0.0
    %348 = vmatpush1.msra.mxu0 0.0
    %349 = vmatprep.subr.mxu0 0.0
    %350 = vmatpush1.msra.mxu0 0.0
    %351 = vmatprep.subr.mxu0 0.0
    %352 = vmatpush1.msra.mxu0 0.0
    %353 = vmatprep.subr.mxu0 0.0
    %354 = vmatpush1.msra.mxu0 0.0
    %355 = vmatprep.subr.mxu0 0.0
    %356 = vmatpush1.msra.mxu0 0.0
    %357 = vmatprep.subr.mxu0 0.0
    %358 = vmatpush1.msra.mxu0 0.0
    %359 = vmatprep.subr.mxu0 0.0
    %360 = vmatpush1.msra.mxu0 0.0
    %361 = vmatprep.subr.mxu0 0.0
    %362 = vmatpush1.msra.mxu0 0.0
    %363 = vmatprep.subr.mxu0 0.0
    %364 = vmatpush1.msra.mxu0 0.0
    %365 = vmatprep.subr.mxu0 0.0
    %366 = vmatpush1.msra.mxu0 0.0
    %367 = vmatprep.mubr.f32.mxu0 0.0
    %368 = vmatmul.mubr.f32.gmra.mrb[0].mxu0 %v301
    %v369 = vpop.f32.mrb[0].mxu0
    %v370 = vadd.f32 0.0, %v369
    %v371 = vpop.f32.mrb[0].mxu0
    %v372 = vadd.f32 0.0, %v371
    %373 = vdwg.mxu0
    %v374 = vadd.f32 %v267, %v370
    %v375 = vadd.f32 %v268, %v372
    %v376 = vmul.f32 %v374, %v263
    %v377 = vmul.f32 %v375, %v264
    %v378 = vxor.u32 %v376, 2147483648
    %v379 = vxor.u32 %v377, 2147483648
    %v380 = vmul.f32 %v378, 1.442695
    %v381 = vpow.pop %v380
    %v382 = vmul.f32 %v379, 1.442695
    %v383 = vpow.pop %v382
    %v384 = vadd.f32 %v381, 1.0
    %v385 = vadd.f32 %v383, 1.0
    %v386 = vrcp.pop %v384
    %v387 = vmul.f32 1.0, %v386
    %v388 = vrcp.pop %v385
    %v389 = vmul.f32 1.0, %v388
    %v390 = vmul.f32 %v387, %v263
    %v391 = vmul.f32 %v389, %v264
    %v392 = vsub.f32 %v390, %v265
    %v393 = vsub.f32 %v391, %v266
    %v394 = vmul.f32 %v392, 0.0
    %v395 = vmul.f32 %v392, %v393
    %397 = vrot.lane.b32.xlu0 %v395, 64
    %v398 = vpop.permute.xlu0 %397
    %v400 = vadd.f32 %v394, %v398
    %v401 = vtanh.pop %v400
    %v402 = vmul.f32 %v393, %v401
    %404 = vrot.lane.b32.xlu0 %v402, 64
    %v405 = vpop.permute.xlu0 %404
    %v406 = vsel %vm299, %v405, 0
    %408 = vmatprep.subr.mxu0 %v284
    %409 = vmatpush1.msra.mxu0 %v283
    %410 = vmatprep.subr.mxu0 %v286
    %411 = vmatpush1.msra.mxu0 %v285
    %412 = vmatprep.subr.mxu0 %v288
    %413 = vmatpush1.msra.mxu0 %v287
    %414 = vmatprep.subr.mxu0 %v290
    %415 = vmatpush1.msra.mxu0 %v289
    %416 = vmatprep.subr.mxu0 %v292
    %417 = vmatpush1.msra.mxu0 %v291
    %418 = vmatprep.subr.mxu0 %v294
    %419 = vmatpush1.msra.mxu0 %v293
    %420 = vmatprep.subr.mxu0 %v296
    %421 = vmatpush1.msra.mxu0 %v295
    %422 = vmatprep.subr.mxu0 %v298
    %423 = vmatpush1.msra.mxu0 %v297
    %424 = vmatprep.subr.mxu0 0.0
    %425 = vmatpush1.msra.mxu0 0.0
    %426 = vmatprep.subr.mxu0 0.0
    %427 = vmatpush1.msra.mxu0 0.0
    %428 = vmatprep.subr.mxu0 0.0
    %429 = vmatpush1.msra.mxu0 0.0
    %430 = vmatprep.subr.mxu0 0.0
    %431 = vmatpush1.msra.mxu0 0.0
    %432 = vmatprep.subr.mxu0 0.0
    %433 = vmatpush1.msra.mxu0 0.0
    %434 = vmatprep.subr.mxu0 0.0
    %435 = vmatpush1.msra.mxu0 0.0
    %436 = vmatprep.subr.mxu0 0.0
    %437 = vmatpush1.msra.mxu0 0.0
    %438 = vmatprep.subr.mxu0 0.0
    %439 = vmatpush1.msra.mxu0 0.0
    %440 = vmatprep.subr.mxu0 0.0
    %441 = vmatpush1.msra.mxu0 0.0
    %442 = vmatprep.subr.mxu0 0.0
    %443 = vmatpush1.msra.mxu0 0.0
    %444 = vmatprep.subr.mxu0 0.0
    %445 = vmatpush1.msra.mxu0 0.0
    %446 = vmatprep.subr.mxu0 0.0
    %447 = vmatpush1.msra.mxu0 0.0
    %448 = vmatprep.subr.mxu0 0.0
    %449 = vmatpush1.msra.mxu0 0.0
    %450 = vmatprep.subr.mxu0 0.0
    %451 = vmatpush1.msra.mxu0 0.0
    %452 = vmatprep.subr.mxu0 0.0
    %453 = vmatpush1.msra.mxu0 0.0
    %454 = vmatprep.subr.mxu0 0.0
    %455 = vmatpush1.msra.mxu0 0.0
    %456 = vmatprep.subr.mxu0 0.0
    %457 = vmatpush1.msra.mxu0 0.0
    %458 = vmatprep.subr.mxu0 0.0
    %459 = vmatpush1.msra.mxu0 0.0
    %460 = vmatprep.subr.mxu0 0.0
    %461 = vmatpush1.msra.mxu0 0.0
    %462 = vmatprep.subr.mxu0 0.0
    %463 = vmatpush1.msra.mxu0 0.0
    %464 = vmatprep.subr.mxu0 0.0
    %465 = vmatpush1.msra.mxu0 0.0
    %466 = vmatprep.subr.mxu0 0.0
    %467 = vmatpush1.msra.mxu0 0.0
    %468 = vmatprep.subr.mxu0 0.0
    %469 = vmatpush1.msra.mxu0 0.0
    %470 = vmatprep.subr.mxu0 0.0
    %471 = vmatpush1.msra.mxu0 0.0
    %472 = vmatprep.mubr.f32.mxu0 0.0
    %473 = vmatmul.mubr.f32.gmra.mrb[0].mxu0 %v406
    %v474 = vpop.f32.mrb[0].mxu0
    %v475 = vadd.f32 0.0, %v474
    %v476 = vpop.f32.mrb[0].mxu0
    %v477 = vadd.f32 0.0, %v476
    %478 = vdwg.mxu0
    %v479 = vadd.f32 %v269, %v475
    %v480 = vadd.f32 %v270, %v477
    %v481 = vmul.f32 %v479, %v263
    %v482 = vmul.f32 %v480, %v264
    %v483 = vxor.u32 %v481, 2147483648
    %v484 = vxor.u32 %v482, 2147483648
    %v485 = vmul.f32 %v483, 1.442695
    %v486 = vpow.pop %v485
    %v487 = vmul.f32 %v484, 1.442695
    %v488 = vpow.pop %v487
    %v489 = vadd.f32 %v486, 1.0
    %v490 = vadd.f32 %v488, 1.0
    %v491 = vrcp.pop %v489
    %v492 = vmul.f32 1.0, %v491
    %v493 = vrcp.pop %v490
    %v494 = vmul.f32 1.0, %v493
    %v495 = vmul.f32 %v492, %v263
    %v496 = vmul.f32 %v494, %v264
    %v497 = vsub.f32 %v495, %v265
    %v498 = vsub.f32 %v496, %v266
    %v499 = vmul.f32 %v497, %v400
    %v500 = vmul.f32 %v497, %v498
    %502 = vrot.lane.b32.xlu0 %v500, 64
    %v503 = vpop.permute.xlu0 %502
    %v505 = vadd.f32 %v499, %v503
    %v506 = vtanh.pop %v505
    %v507 = vmul.f32 %v498, %v506
    %v508 = vmax.f32 %v402, %v507
    %510 = vrot.lane.b32.xlu0 %v507, 64
    %v511 = vpop.permute.xlu0 %510
    %v512 = vsel %vm299, %v511, 0
    %514 = vmatprep.subr.mxu0 %v284
    %515 = vmatpush1.msra.mxu0 %v283
    %516 = vmatprep.subr.mxu0 %v286
    %517 = vmatpush1.msra.mxu0 %v285
    %518 = vmatprep.subr.mxu0 %v288
    %519 = vmatpush1.msra.mxu0 %v287
    %520 = vmatprep.subr.mxu0 %v290
    %521 = vmatpush1.msra.mxu0 %v289
    %522 = vmatprep.subr.mxu0 %v292
    %523 = vmatpush1.msra.mxu0 %v291
    %524 = vmatprep.subr.mxu0 %v294
    %525 = vmatpush1.msra.mxu0 %v293
    %526 = vmatprep.subr.mxu0 %v296
    %527 = vmatpush1.msra.mxu0 %v295
    %528 = vmatprep.subr.mxu0 %v298
    %529 = vmatpush1.msra.mxu0 %v297
    %530 = vmatprep.subr.mxu0 0.0
    %531 = vmatpush1.msra.mxu0 0.0
    %532 = vmatprep.subr.mxu0 0.0
    %533 = vmatpush1.msra.mxu0 0.0
    %534 = vmatprep.subr.mxu0 0.0
    %535 = vmatpush1.msra.mxu0 0.0
    %536 = vmatprep.subr.mxu0 0.0
    %537 = vmatpush1.msra.mxu0 0.0
    %538 = vmatprep.subr.mxu0 0.0
    %539 = vmatpush1.msra.mxu0 0.0
    %540 = vmatprep.subr.mxu0 0.0
    %541 = vmatpush1.msra.mxu0 0.0
    %542 = vmatprep.subr.mxu0 0.0
    %543 = vmatpush1.msra.mxu0 0.0
    %544 = vmatprep.subr.mxu0 0.0
    %545 = vmatpush1.msra.mxu0 0.0
    %546 = vmatprep.subr.mxu0 0.0
    %547 = vmatpush1.msra.mxu0 0.0
    %548 = vmatprep.subr.mxu0 0.0
    %549 = vmatpush1.msra.mxu0 0.0
    %550 = vmatprep.subr.mxu0 0.0
    %551 = vmatpush1.msra.mxu0 0.0
    %552 = vmatprep.subr.mxu0 0.0
    %553 = vmatpush1.msra.mxu0 0.0
    %554 = vmatprep.subr.mxu0 0.0
    %555 = vmatpush1.msra.mxu0 0.0
    %556 = vmatprep.subr.mxu0 0.0
    %557 = vmatpush1.msra.mxu0 0.0
    %558 = vmatprep.subr.mxu0 0.0
    %559 = vmatpush1.msra.mxu0 0.0
    %560 = vmatprep.subr.mxu0 0.0
    %561 = vmatpush1.msra.mxu0 0.0
    %562 = vmatprep.subr.mxu0 0.0
    %563 = vmatpush1.msra.mxu0 0.0
    %564 = vmatprep.subr.mxu0 0.0
    %565 = vmatpush1.msra.mxu0 0.0
    %566 = vmatprep.subr.mxu0 0.0
    %567 = vmatpush1.msra.mxu0 0.0
    %568 = vmatprep.subr.mxu0 0.0
    %569 = vmatpush1.msra.mxu0 0.0
    %570 = vmatprep.subr.mxu0 0.0
    %571 = vmatpush1.msra.mxu0 0.0
    %572 = vmatprep.subr.mxu0 0.0
    %573 = vmatpush1.msra.mxu0 0.0
    %574 = vmatprep.subr.mxu0 0.0
    %575 = vmatpush1.msra.mxu0 0.0
    %576 = vmatprep.subr.mxu0 0.0
    %577 = vmatpush1.msra.mxu0 0.0
    %578 = vmatprep.mubr.f32.mxu0 0.0
    %579 = vmatmul.mubr.f32.gmra.mrb[0].mxu0 %v512
    %v580 = vpop.f32.mrb[0].mxu0
    %v581 = vadd.f32 0.0, %v580
    %v582 = vpop.f32.mrb[0].mxu0
    %v583 = vadd.f32 0.0, %v582
    %584 = vdwg.mxu0
    %v585 = vadd.f32 %v271, %v581
    %v586 = vadd.f32 %v272, %v583
    %v587 = vmul.f32 %v585, %v263
    %v588 = vmul.f32 %v586, %v264
    %v589 = vxor.u32 %v587, 2147483648
    %v590 = vxor.u32 %v588, 2147483648
    %v591 = vmul.f32 %v589, 1.442695
    %v592 = vpow.pop %v591
    %v593 = vmul.f32 %v590, 1.442695
    %v594 = vpow.pop %v593
    %v595 = vadd.f32 %v592, 1.0
    %v596 = vadd.f32 %v594, 1.0
    %v597 = vrcp.pop %v595
    %v598 = vmul.f32 1.0, %v597
    %v599 = vrcp.pop %v596
    %v600 = vmul.f32 1.0, %v599
    %v601 = vmul.f32 %v598, %v263
    %v602 = vmul.f32 %v600, %v264
    %v603 = vsub.f32 %v601, %v265
    %v604 = vsub.f32 %v602, %v266
    %v605 = vmul.f32 %v603, %v505
    %v606 = vmul.f32 %v603, %v604
    %608 = vrot.lane.b32.xlu0 %v606, 64
    %v609 = vpop.permute.xlu0 %608
    %v611 = vadd.f32 %v605, %v609
    %v612 = vtanh.pop %v611
    %v613 = vmul.f32 %v604, %v612
    %v614 = vmax.f32 %v508, %v613
    %616 = vrot.lane.b32.xlu0 %v613, 64
    %v617 = vpop.permute.xlu0 %616
    %v618 = vsel %vm299, %v617, 0
    %620 = vmatprep.subr.mxu0 %v284
    %621 = vmatpush1.msra.mxu0 %v283
    %622 = vmatprep.subr.mxu0 %v286
    %623 = vmatpush1.msra.mxu0 %v285
    %624 = vmatprep.subr.mxu0 %v288
    %625 = vmatpush1.msra.mxu0 %v287
    %626 = vmatprep.subr.mxu0 %v290
    %627 = vmatpush1.msra.mxu0 %v289
    %628 = vmatprep.subr.mxu0 %v292
    %629 = vmatpush1.msra.mxu0 %v291
    %630 = vmatprep.subr.mxu0 %v294
    %631 = vmatpush1.msra.mxu0 %v293
    %632 = vmatprep.subr.mxu0 %v296
    %633 = vmatpush1.msra.mxu0 %v295
    %634 = vmatprep.subr.mxu0 %v298
    %635 = vmatpush1.msra.mxu0 %v297
    %636 = vmatprep.subr.mxu0 0.0
    %637 = vmatpush1.msra.mxu0 0.0
    %638 = vmatprep.subr.mxu0 0.0
    %639 = vmatpush1.msra.mxu0 0.0
    %640 = vmatprep.subr.mxu0 0.0
    %641 = vmatpush1.msra.mxu0 0.0
    %642 = vmatprep.subr.mxu0 0.0
    %643 = vmatpush1.msra.mxu0 0.0
    %644 = vmatprep.subr.mxu0 0.0
    %645 = vmatpush1.msra.mxu0 0.0
    %646 = vmatprep.subr.mxu0 0.0
    %647 = vmatpush1.msra.mxu0 0.0
    %648 = vmatprep.subr.mxu0 0.0
    %649 = vmatpush1.msra.mxu0 0.0
    %650 = vmatprep.subr.mxu0 0.0
    %651 = vmatpush1.msra.mxu0 0.0
    %652 = vmatprep.subr.mxu0 0.0
    %653 = vmatpush1.msra.mxu0 0.0
    %654 = vmatprep.subr.mxu0 0.0
    %655 = vmatpush1.msra.mxu0 0.0
    %656 = vmatprep.subr.mxu0 0.0
    %657 = vmatpush1.msra.mxu0 0.0
    %658 = vmatprep.subr.mxu0 0.0
    %659 = vmatpush1.msra.mxu0 0.0
    %660 = vmatprep.subr.mxu0 0.0
    %661 = vmatpush1.msra.mxu0 0.0
    %662 = vmatprep.subr.mxu0 0.0
    %663 = vmatpush1.msra.mxu0 0.0
    %664 = vmatprep.subr.mxu0 0.0
    %665 = vmatpush1.msra.mxu0 0.0
    %666 = vmatprep.subr.mxu0 0.0
    %667 = vmatpush1.msra.mxu0 0.0
    %668 = vmatprep.subr.mxu0 0.0
    %669 = vmatpush1.msra.mxu0 0.0
    %670 = vmatprep.subr.mxu0 0.0
    %671 = vmatpush1.msra.mxu0 0.0
    %672 = vmatprep.subr.mxu0 0.0
    %673 = vmatpush1.msra.mxu0 0.0
    %674 = vmatprep.subr.mxu0 0.0
    %675 = vmatpush1.msra.mxu0 0.0
    %676 = vmatprep.subr.mxu0 0.0
    %677 = vmatpush1.msra.mxu0 0.0
    %678 = vmatprep.subr.mxu0 0.0
    %679 = vmatpush1.msra.mxu0 0.0
    %680 = vmatprep.subr.mxu0 0.0
    %681 = vmatpush1.msra.mxu0 0.0
    %682 = vmatprep.subr.mxu0 0.0
    %683 = vmatpush1.msra.mxu0 0.0
    %684 = vmatprep.mubr.f32.mxu0 0.0
    %685 = vmatmul.mubr.f32.gmra.mrb[0].mxu0 %v618
    %v686 = vpop.f32.mrb[0].mxu0
    %v687 = vadd.f32 0.0, %v686
    %v688 = vpop.f32.mrb[0].mxu0
    %v689 = vadd.f32 0.0, %v688
    %690 = vdwg.mxu0
    %v691 = vadd.f32 %v273, %v687
    %v692 = vadd.f32 %v274, %v689
    %v693 = vmul.f32 %v691, %v263
    %v694 = vmul.f32 %v692, %v264
    %v695 = vxor.u32 %v693, 2147483648
    %v696 = vxor.u32 %v694, 2147483648
    %v697 = vmul.f32 %v695, 1.442695
    %v698 = vpow.pop %v697
    %v699 = vmul.f32 %v696, 1.442695
    %v700 = vpow.pop %v699
    %v701 = vadd.f32 %v698, 1.0
    %v702 = vadd.f32 %v700, 1.0
    %v703 = vrcp.pop %v701
    %v704 = vmul.f32 1.0, %v703
    %v705 = vrcp.pop %v702
    %v706 = vmul.f32 1.0, %v705
    %v707 = vmul.f32 %v704, %v263
    %v708 = vmul.f32 %v706, %v264
    %v709 = vsub.f32 %v707, %v265
    %v710 = vsub.f32 %v708, %v266
    %v711 = vmul.f32 %v709, %v611
    %v712 = vmul.f32 %v709, %v710
    %714 = vrot.lane.b32.xlu0 %v712, 64
    %v715 = vpop.permute.xlu0 %714
    %v717 = vadd.f32 %v711, %v715
    %v718 = vtanh.pop %v717
    %v719 = vmul.f32 %v710, %v718
    %v720 = vmax.f32 %v614, %v719
    %722 = vrot.lane.b32.xlu0 %v719, 64
    %v723 = vpop.permute.xlu0 %722
    %v724 = vsel %vm299, %v723, 0
    %726 = vmatprep.subr.mxu0 %v284
    %727 = vmatpush1.msra.mxu0 %v283
    %728 = vmatprep.subr.mxu0 %v286
    %729 = vmatpush1.msra.mxu0 %v285
    %730 = vmatprep.subr.mxu0 %v288
    %731 = vmatpush1.msra.mxu0 %v287
    %732 = vmatprep.subr.mxu0 %v290
    %733 = vmatpush1.msra.mxu0 %v289
    %734 = vmatprep.subr.mxu0 %v292
    %735 = vmatpush1.msra.mxu0 %v291
    %736 = vmatprep.subr.mxu0 %v294
    %737 = vmatpush1.msra.mxu0 %v293
    %738 = vmatprep.subr.mxu0 %v296
    %739 = vmatpush1.msra.mxu0 %v295
    %740 = vmatprep.subr.mxu0 %v298
    %741 = vmatpush1.msra.mxu0 %v297
    %742 = vmatprep.subr.mxu0 0.0
    %743 = vmatpush1.msra.mxu0 0.0
    %744 = vmatprep.subr.mxu0 0.0
    %745 = vmatpush1.msra.mxu0 0.0
    %746 = vmatprep.subr.mxu0 0.0
    %747 = vmatpush1.msra.mxu0 0.0
    %748 = vmatprep.subr.mxu0 0.0
    %749 = vmatpush1.msra.mxu0 0.0
    %750 = vmatprep.subr.mxu0 0.0
    %751 = vmatpush1.msra.mxu0 0.0
    %752 = vmatprep.subr.mxu0 0.0
    %753 = vmatpush1.msra.mxu0 0.0
    %754 = vmatprep.subr.mxu0 0.0
    %755 = vmatpush1.msra.mxu0 0.0
    %756 = vmatprep.subr.mxu0 0.0
    %757 = vmatpush1.msra.mxu0 0.0
    %758 = vmatprep.subr.mxu0 0.0
    %759 = vmatpush1.msra.mxu0 0.0
    %760 = vmatprep.subr.mxu0 0.0
    %761 = vmatpush1.msra.mxu0 0.0
    %762 = vmatprep.subr.mxu0 0.0
    %763 = vmatpush1.msra.mxu0 0.0
    %764 = vmatprep.subr.mxu0 0.0
    %765 = vmatpush1.msra.mxu0 0.0
    %766 = vmatprep.subr.mxu0 0.0
    %767 = vmatpush1.msra.mxu0 0.0
    %768 = vmatprep.subr.mxu0 0.0
    %769 = vmatpush1.msra.mxu0 0.0
    %770 = vmatprep.subr.mxu0 0.0
    %771 = vmatpush1.msra.mxu0 0.0
    %772 = vmatprep.subr.mxu0 0.0
    %773 = vmatpush1.msra.mxu0 0.0
    %774 = vmatprep.subr.mxu0 0.0
    %775 = vmatpush1.msra.mxu0 0.0
    %776 = vmatprep.subr.mxu0 0.0
    %777 = vmatpush1.msra.mxu0 0.0
    %778 = vmatprep.subr.mxu0 0.0
    %779 = vmatpush1.msra.mxu0 0.0
    %780 = vmatprep.subr.mxu0 0.0
    %781 = vmatpush1.msra.mxu0 0.0
    %782 = vmatprep.subr.mxu0 0.0
    %783 = vmatpush1.msra.mxu0 0.0
    %784 = vmatprep.subr.mxu0 0.0
    %785 = vmatpush1.msra.mxu0 0.0
    %786 = vmatprep.subr.mxu0 0.0
    %787 = vmatpush1.msra.mxu0 0.0
    %788 = vmatprep.subr.mxu0 0.0
    %789 = vmatpush1.msra.mxu0 0.0
    %790 = vmatprep.mubr.f32.mxu0 0.0
    %791 = vmatmul.mubr.f32.gmra.mrb[0].mxu0 %v724
    %v792 = vpop.f32.mrb[0].mxu0
    %v793 = vadd.f32 0.0, %v792
    %v794 = vpop.f32.mrb[0].mxu0
    %v795 = vadd.f32 0.0, %v794
    %796 = vdwg.mxu0
    %v797 = vadd.f32 %v275, %v793
    %v798 = vadd.f32 %v276, %v795
    %v799 = vmul.f32 %v797, %v263
    %v800 = vmul.f32 %v798, %v264
    %v801 = vxor.u32 %v799, 2147483648
    %v802 = vxor.u32 %v800, 2147483648
    %v803 = vmul.f32 %v801, 1.442695
    %v804 = vpow.pop %v803
    %v805 = vmul.f32 %v802, 1.442695
    %v806 = vpow.pop %v805
    %v807 = vadd.f32 %v804, 1.0
    %v808 = vadd.f32 %v806, 1.0
    %v809 = vrcp.pop %v807
    %v810 = vmul.f32 1.0, %v809
    %v811 = vrcp.pop %v808
    %v812 = vmul.f32 1.0, %v811
    %v813 = vmul.f32 %v810, %v263
    %v814 = vmul.f32 %v812, %v264
    %v815 = vsub.f32 %v813, %v265
    %v816 = vsub.f32 %v814, %v266
    %v817 = vmul.f32 %v815, %v717
    %v818 = vmul.f32 %v815, %v816
    %820 = vrot.lane.b32.xlu0 %v818, 64
    %v821 = vpop.permute.xlu0 %820
    %v823 = vadd.f32 %v817, %v821
    %v824 = vtanh.pop %v823
    %v825 = vmul.f32 %v816, %v824
    %v826 = vmax.f32 %v720, %v825
    %828 = vrot.lane.b32.xlu0 %v825, 64
    %v829 = vpop.permute.xlu0 %828
    %v830 = vsel %vm299, %v829, 0
    %832 = vmatprep.subr.mxu0 %v284
    %833 = vmatpush1.msra.mxu0 %v283
    %834 = vmatprep.subr.mxu0 %v286
    %835 = vmatpush1.msra.mxu0 %v285
    %836 = vmatprep.subr.mxu0 %v288
    %837 = vmatpush1.msra.mxu0 %v287
    %838 = vmatprep.subr.mxu0 %v290
    %839 = vmatpush1.msra.mxu0 %v289
    %840 = vmatprep.subr.mxu0 %v292
    %841 = vmatpush1.msra.mxu0 %v291
    %842 = vmatprep.subr.mxu0 %v294
    %843 = vmatpush1.msra.mxu0 %v293
    %844 = vmatprep.subr.mxu0 %v296
    %845 = vmatpush1.msra.mxu0 %v295
    %846 = vmatprep.subr.mxu0 %v298
    %847 = vmatpush1.msra.mxu0 %v297
    %848 = vmatprep.subr.mxu0 0.0
    %849 = vmatpush1.msra.mxu0 0.0
    %850 = vmatprep.subr.mxu0 0.0
    %851 = vmatpush1.msra.mxu0 0.0
    %852 = vmatprep.subr.mxu0 0.0
    %853 = vmatpush1.msra.mxu0 0.0
    %854 = vmatprep.subr.mxu0 0.0
    %855 = vmatpush1.msra.mxu0 0.0
    %856 = vmatprep.subr.mxu0 0.0
    %857 = vmatpush1.msra.mxu0 0.0
    %858 = vmatprep.subr.mxu0 0.0
    %859 = vmatpush1.msra.mxu0 0.0
    %860 = vmatprep.subr.mxu0 0.0
    %861 = vmatpush1.msra.mxu0 0.0
    %862 = vmatprep.subr.mxu0 0.0
    %863 = vmatpush1.msra.mxu0 0.0
    %864 = vmatprep.subr.mxu0 0.0
    %865 = vmatpush1.msra.mxu0 0.0
    %866 = vmatprep.subr.mxu0 0.0
    %867 = vmatpush1.msra.mxu0 0.0
    %868 = vmatprep.subr.mxu0 0.0
    %869 = vmatpush1.msra.mxu0 0.0
    %870 = vmatprep.subr.mxu0 0.0
    %871 = vmatpush1.msra.mxu0 0.0
    %872 = vmatprep.subr.mxu0 0.0
    %873 = vmatpush1.msra.mxu0 0.0
    %874 = vmatprep.subr.mxu0 0.0
    %875 = vmatpush1.msra.mxu0 0.0
    %876 = vmatprep.subr.mxu0 0.0
    %877 = vmatpush1.msra.mxu0 0.0
    %878 = vmatprep.subr.mxu0 0.0
    %879 = vmatpush1.msra.mxu0 0.0
    %880 = vmatprep.subr.mxu0 0.0
    %881 = vmatpush1.msra.mxu0 0.0
    %882 = vmatprep.subr.mxu0 0.0
    %883 = vmatpush1.msra.mxu0 0.0
    %884 = vmatprep.subr.mxu0 0.0
    %885 = vmatpush1.msra.mxu0 0.0
    %886 = vmatprep.subr.mxu0 0.0
    %887 = vmatpush1.msra.mxu0 0.0
    %888 = vmatprep.subr.mxu0 0.0
    %889 = vmatpush1.msra.mxu0 0.0
    %890 = vmatprep.subr.mxu0 0.0
    %891 = vmatpush1.msra.mxu0 0.0
    %892 = vmatprep.subr.mxu0 0.0
    %893 = vmatpush1.msra.mxu0 0.0
    %894 = vmatprep.subr.mxu0 0.0
    %895 = vmatpush1.msra.mxu0 0.0
    %896 = vmatprep.mubr.f32.mxu0 0.0
    %897 = vmatmul.mubr.f32.gmra.mrb[0].mxu0 %v830
    %v898 = vpop.f32.mrb[0].mxu0
    %v899 = vadd.f32 0.0, %v898
    %v900 = vpop.f32.mrb[0].mxu0
    %v901 = vadd.f32 0.0, %v900
    %902 = vdwg.mxu0
    %v903 = vadd.f32 %v277, %v899
    %v904 = vadd.f32 %v278, %v901
    %v905 = vmul.f32 %v903, %v263
    %v906 = vmul.f32 %v904, %v264
    %v907 = vxor.u32 %v905, 2147483648
    %v908 = vxor.u32 %v906, 2147483648
    %v909 = vmul.f32 %v907, 1.442695
    %v910 = vpow.pop %v909
    %v911 = vmul.f32 %v908, 1.442695
    %v912 = vpow.pop %v911
    %v913 = vadd.f32 %v910, 1.0
    %v914 = vadd.f32 %v912, 1.0
    %v915 = vrcp.pop %v913
    %v916 = vmul.f32 1.0, %v915
    %v917 = vrcp.pop %v914
    %v918 = vmul.f32 1.0, %v917
    %v919 = vmul.f32 %v916, %v263
    %v920 = vmul.f32 %v918, %v264
    %v921 = vsub.f32 %v919, %v265
    %v922 = vsub.f32 %v920, %v266
    %v923 = vmul.f32 %v921, %v823
    %v924 = vmul.f32 %v921, %v922
    %926 = vrot.lane.b32.xlu0 %v924, 64
    %v927 = vpop.permute.xlu0 %926
    %v929 = vadd.f32 %v923, %v927
    %v930 = vtanh.pop %v929
    %v931 = vmul.f32 %v922, %v930
    %v932 = vmax.f32 %v826, %v931
    %934 = vrot.lane.b32.xlu0 %v931, 64
    %v935 = vpop.permute.xlu0 %934
    %v936 = vsel %vm299, %v935, 0
    %938 = vmatprep.subr.mxu0 %v284
    %939 = vmatpush1.msra.mxu0 %v283
    %940 = vmatprep.subr.mxu0 %v286
    %941 = vmatpush1.msra.mxu0 %v285
    %942 = vmatprep.subr.mxu0 %v288
    %943 = vmatpush1.msra.mxu0 %v287
    %944 = vmatprep.subr.mxu0 %v290
    %945 = vmatpush1.msra.mxu0 %v289
    %946 = vmatprep.subr.mxu0 %v292
    %947 = vmatpush1.msra.mxu0 %v291
    %948 = vmatprep.subr.mxu0 %v294
    %949 = vmatpush1.msra.mxu0 %v293
    %950 = vmatprep.subr.mxu0 %v296
    %951 = vmatpush1.msra.mxu0 %v295
    %952 = vmatprep.subr.mxu0 %v298
    %953 = vmatpush1.msra.mxu0 %v297
    %954 = vmatprep.subr.mxu0 0.0
    %955 = vmatpush1.msra.mxu0 0.0
    %956 = vmatprep.subr.mxu0 0.0
    %957 = vmatpush1.msra.mxu0 0.0
    %958 = vmatprep.subr.mxu0 0.0
    %959 = vmatpush1.msra.mxu0 0.0
    %960 = vmatprep.subr.mxu0 0.0
    %961 = vmatpush1.msra.mxu0 0.0
    %962 = vmatprep.subr.mxu0 0.0
    %963 = vmatpush1.msra.mxu0 0.0
    %964 = vmatprep.subr.mxu0 0.0
    %965 = vmatpush1.msra.mxu0 0.0
    %966 = vmatprep.subr.mxu0 0.0
    %967 = vmatpush1.msra.mxu0 0.0
    %968 = vmatprep.subr.mxu0 0.0
    %969 = vmatpush1.msra.mxu0 0.0
    %970 = vmatprep.subr.mxu0 0.0
    %971 = vmatpush1.msra.mxu0 0.0
    %972 = vmatprep.subr.mxu0 0.0
    %973 = vmatpush1.msra.mxu0 0.0
    %974 = vmatprep.subr.mxu0 0.0
    %975 = vmatpush1.msra.mxu0 0.0
    %976 = vmatprep.subr.mxu0 0.0
    %977 = vmatpush1.msra.mxu0 0.0
    %978 = vmatprep.subr.mxu0 0.0
    %979 = vmatpush1.msra.mxu0 0.0
    %980 = vmatprep.subr.mxu0 0.0
    %981 = vmatpush1.msra.mxu0 0.0
    %982 = vmatprep.subr.mxu0 0.0
    %983 = vmatpush1.msra.mxu0 0.0
    %984 = vmatprep.subr.mxu0 0.0
    %985 = vmatpush1.msra.mxu0 0.0
    %986 = vmatprep.subr.mxu0 0.0
    %987 = vmatpush1.msra.mxu0 0.0
    %988 = vmatprep.subr.mxu0 0.0
    %989 = vmatpush1.msra.mxu0 0.0
    %990 = vmatprep.subr.mxu0 0.0
    %991 = vmatpush1.msra.mxu0 0.0
    %992 = vmatprep.subr.mxu0 0.0
    %993 = vmatpush1.msra.mxu0 0.0
    %994 = vmatprep.subr.mxu0 0.0
    %995 = vmatpush1.msra.mxu0 0.0
    %996 = vmatprep.subr.mxu0 0.0
    %997 = vmatpush1.msra.mxu0 0.0
    %998 = vmatprep.subr.mxu0 0.0
    %999 = vmatpush1.msra.mxu0 0.0
    %1000 = vmatprep.subr.mxu0 0.0
    %1001 = vmatpush1.msra.mxu0 0.0
    %1002 = vmatprep.mubr.f32.mxu0 0.0
    %1003 = vmatmul.mubr.f32.gmra.mrb[0].mxu0 %v936
    %v1004 = vpop.f32.mrb[0].mxu0
    %v1005 = vadd.f32 0.0, %v1004
    %v1006 = vpop.f32.mrb[0].mxu0
    %v1007 = vadd.f32 0.0, %v1006
    %1008 = vdwg.mxu0
    %v1009 = vadd.f32 %v279, %v1005
    %v1010 = vadd.f32 %v280, %v1007
    %v1011 = vmul.f32 %v1009, %v263
    %v1012 = vmul.f32 %v1010, %v264
    %v1013 = vxor.u32 %v1011, 2147483648
    %v1014 = vxor.u32 %v1012, 2147483648
    %v1015 = vmul.f32 %v1013, 1.442695
    %v1016 = vpow.pop %v1015
    %v1017 = vmul.f32 %v1014, 1.442695
    %v1018 = vpow.pop %v1017
    %v1019 = vadd.f32 %v1016, 1.0
    %v1020 = vadd.f32 %v1018, 1.0
    %v1021 = vrcp.pop %v1019
    %v1022 = vmul.f32 1.0, %v1021
    %v1023 = vrcp.pop %v1020
    %v1024 = vmul.f32 1.0, %v1023
    %v1025 = vmul.f32 %v1022, %v263
    %v1026 = vmul.f32 %v1024, %v264
    %v1027 = vsub.f32 %v1025, %v265
    %v1028 = vsub.f32 %v1026, %v266
    %v1029 = vmul.f32 %v1027, %v929
    %v1030 = vmul.f32 %v1027, %v1028
    %1032 = vrot.lane.b32.xlu0 %v1030, 64
    %v1033 = vpop.permute.xlu0 %1032
    %v1035 = vadd.f32 %v1029, %v1033
    %v1036 = vtanh.pop %v1035
    %v1037 = vmul.f32 %v1028, %v1036
    %v1038 = vmax.f32 %v932, %v1037
    %1040 = vrot.lane.b32.xlu0 %v1037, 64
    %v1041 = vpop.permute.xlu0 %1040
    %v1042 = vsel %vm299, %v1041, 0
    %1044 = vmatprep.subr.mxu0 %v284
    %1045 = vmatpush1.msra.mxu0 %v283
    %1046 = vmatprep.subr.mxu0 %v286
    %1047 = vmatpush1.msra.mxu0 %v285
    %1048 = vmatprep.subr.mxu0 %v288
    %1049 = vmatpush1.msra.mxu0 %v287
    %1050 = vmatprep.subr.mxu0 %v290
    %1051 = vmatpush1.msra.mxu0 %v289
    %1052 = vmatprep.subr.mxu0 %v292
    %1053 = vmatpush1.msra.mxu0 %v291
    %1054 = vmatprep.subr.mxu0 %v294
    %1055 = vmatpush1.msra.mxu0 %v293
    %1056 = vmatprep.subr.mxu0 %v296
    %1057 = vmatpush1.msra.mxu0 %v295
    %1058 = vmatprep.subr.mxu0 %v298
    %1059 = vmatpush1.msra.mxu0 %v297
    %1060 = vmatprep.subr.mxu0 0.0
    %1061 = vmatpush1.msra.mxu0 0.0
    %1062 = vmatprep.subr.mxu0 0.0
    %1063 = vmatpush1.msra.mxu0 0.0
    %1064 = vmatprep.subr.mxu0 0.0
    %1065 = vmatpush1.msra.mxu0 0.0
    %1066 = vmatprep.subr.mxu0 0.0
    %1067 = vmatpush1.msra.mxu0 0.0
    %1068 = vmatprep.subr.mxu0 0.0
    %1069 = vmatpush1.msra.mxu0 0.0
    %1070 = vmatprep.subr.mxu0 0.0
    %1071 = vmatpush1.msra.mxu0 0.0
    %1072 = vmatprep.subr.mxu0 0.0
    %1073 = vmatpush1.msra.mxu0 0.0
    %1074 = vmatprep.subr.mxu0 0.0
    %1075 = vmatpush1.msra.mxu0 0.0
    %1076 = vmatprep.subr.mxu0 0.0
    %1077 = vmatpush1.msra.mxu0 0.0
    %1078 = vmatprep.subr.mxu0 0.0
    %1079 = vmatpush1.msra.mxu0 0.0
    %1080 = vmatprep.subr.mxu0 0.0
    %1081 = vmatpush1.msra.mxu0 0.0
    %1082 = vmatprep.subr.mxu0 0.0
    %1083 = vmatpush1.msra.mxu0 0.0
    %1084 = vmatprep.subr.mxu0 0.0
    %1085 = vmatpush1.msra.mxu0 0.0
    %1086 = vmatprep.subr.mxu0 0.0
    %1087 = vmatpush1.msra.mxu0 0.0
    %1088 = vmatprep.subr.mxu0 0.0
    %1089 = vmatpush1.msra.mxu0 0.0
    %1090 = vmatprep.subr.mxu0 0.0
    %1091 = vmatpush1.msra.mxu0 0.0
    %1092 = vmatprep.subr.mxu0 0.0
    %1093 = vmatpush1.msra.mxu0 0.0
    %1094 = vmatprep.subr.mxu0 0.0
    %1095 = vmatpush1.msra.mxu0 0.0
    %1096 = vmatprep.subr.mxu0 0.0
    %1097 = vmatpush1.msra.mxu0 0.0
    %1098 = vmatprep.subr.mxu0 0.0
    %1099 = vmatpush1.msra.mxu0 0.0
    %1100 = vmatprep.subr.mxu0 0.0
    %1101 = vmatpush1.msra.mxu0 0.0
    %1102 = vmatprep.subr.mxu0 0.0
    %1103 = vmatpush1.msra.mxu0 0.0
    %1104 = vmatprep.subr.mxu0 0.0
    %1105 = vmatpush1.msra.mxu0 0.0
    %1106 = vmatprep.subr.mxu0 0.0
    %1107 = vmatpush1.msra.mxu0 0.0
    %1108 = vmatprep.mubr.f32.mxu0 0.0
    %1109 = vmatmul.mubr.f32.gmra.mrb[0].mxu0 %v1042
    %v1110 = vpop.f32.mrb[0].mxu0
    %v1111 = vadd.f32 0.0, %v1110
    %v1112 = vpop.f32.mrb[0].mxu0
    %v1113 = vadd.f32 0.0, %v1112
    %1114 = vdwg.mxu0
    %v1115 = vadd.f32 %v281, %v1111
    %v1116 = vadd.f32 %v282, %v1113
    %v1117 = vmul.f32 %v1115, %v263
    %v1118 = vmul.f32 %v1116, %v264
    %v1119 = vxor.u32 %v1117, 2147483648
    %v1120 = vxor.u32 %v1118, 2147483648
    %v1121 = vmul.f32 %v1119, 1.442695
    %v1122 = vpow.pop %v1121
    %v1123 = vmul.f32 %v1120, 1.442695
    %v1124 = vpow.pop %v1123
    %v1125 = vadd.f32 %v1122, 1.0
    %v1126 = vadd.f32 %v1124, 1.0
    %v1127 = vrcp.pop %v1125
    %v1128 = vmul.f32 1.0, %v1127
    %v1129 = vrcp.pop %v1126
    %v1130 = vmul.f32 1.0, %v1129
    %v1131 = vmul.f32 %v1128, %v263
    %v1132 = vmul.f32 %v1130, %v264
    %v1133 = vsub.f32 %v1131, %v265
    %v1134 = vsub.f32 %v1132, %v266
    %v1135 = vmul.f32 %v1133, %v1035
    %v1136 = vmul.f32 %v1133, %v1134
    %1138 = vrot.lane.b32.xlu0 %v1136, 64
    %v1139 = vpop.permute.xlu0 %1138
    %v1141 = vadd.f32 %v1135, %v1139
    %v1142 = vtanh.pop %v1141
    %v1143 = vmul.f32 %v1134, %v1142
    %v1144 = vmax.f32 %v1038, %v1143
    %v1145 = vld [vmem:[%s2] sm:$0xff]
    %v1146 = vld [vmem:[%s2 + $0x8] sm:$0xff]
    %v1147 = vld [vmem:[%s2 + $0x10] sm:$0xff]
    %v1148 = vld [vmem:[%s2 + $0x18] sm:$0xff]
    %v1149 = vld [vmem:[%s2 + $0x20] sm:$0xff]
    %v1150 = vld [vmem:[%s2 + $0x28] sm:$0xff]
    %v1151 = vld [vmem:[%s2 + $0x30] sm:$0xff]
    %v1152 = vld [vmem:[%s2 + $0x38] sm:$0xff]
    %v1153 = vld [vmem:[%s2 + $0x40] sm:$0x1]
    %v1154 = vld [vmem:[%s2 + $0x41] sm:$0x1]
    %v1155 = vld [vmem:[%s2 + $0x42] sm:$0x1]
    %v1156 = vlaneseq
    %v1157 = vshrl.u32 %v1156, 7
    %v1158 = vsub.s32 0, %v1157
    %v1159 = vrot.slane %v1153, %v1158
    %1161 = vrot.lane.b32.xlu0 %v1144, 64
    %v1162 = vpop.permute.xlu0 %1161
    %v1163 = vsel %vm299, %v1162, 0
    %1165 = vmatprep.subr.mxu0 0.0
    %1166 = vmatpush1.msra.mxu0 %v1145
    %1167 = vmatprep.subr.mxu0 0.0
    %1168 = vmatpush1.msra.mxu0 %v1146
    %1169 = vmatprep.subr.mxu0 0.0
    %1170 = vmatpush1.msra.mxu0 %v1147
    %1171 = vmatprep.subr.mxu0 0.0
    %1172 = vmatpush1.msra.mxu0 %v1148
    %1173 = vmatprep.subr.mxu0 0.0
    %1174 = vmatpush1.msra.mxu0 %v1149
    %1175 = vmatprep.subr.mxu0 0.0
    %1176 = vmatpush1.msra.mxu0 %v1150
    %1177 = vmatprep.subr.mxu0 0.0
    %1178 = vmatpush1.msra.mxu0 %v1151
    %1179 = vmatprep.subr.mxu0 0.0
    %1180 = vmatpush1.msra.mxu0 %v1152
    %1181 = vmatprep.subr.mxu0 0.0
    %1182 = vmatpush1.msra.mxu0 0.0
    %1183 = vmatprep.subr.mxu0 0.0
    %1184 = vmatpush1.msra.mxu0 0.0
    %1185 = vmatprep.subr.mxu0 0.0
    %1186 = vmatpush1.msra.mxu0 0.0
    %1187 = vmatprep.subr.mxu0 0.0
    %1188 = vmatpush1.msra.mxu0 0.0
    %1189 = vmatprep.subr.mxu0 0.0
    %1190 = vmatpush1.msra.mxu0 0.0
    %1191 = vmatprep.subr.mxu0 0.0
    %1192 = vmatpush1.msra.mxu0 0.0
    %1193 = vmatprep.subr.mxu0 0.0
    %1194 = vmatpush1.msra.mxu0 0.0
    %1195 = vmatprep.subr.mxu0 0.0
    %1196 = vmatpush1.msra.mxu0 0.0
    %1197 = vmatprep.subr.mxu0 0.0
    %1198 = vmatpush1.msra.mxu0 0.0
    %1199 = vmatprep.subr.mxu0 0.0
    %1200 = vmatpush1.msra.mxu0 0.0
    %1201 = vmatprep.subr.mxu0 0.0
    %1202 = vmatpush1.msra.mxu0 0.0
    %1203 = vmatprep.subr.mxu0 0.0
    %1204 = vmatpush1.msra.mxu0 0.0
    %1205 = vmatprep.subr.mxu0 0.0
    %1206 = vmatpush1.msra.mxu0 0.0
    %1207 = vmatprep.subr.mxu0 0.0
    %1208 = vmatpush1.msra.mxu0 0.0
    %1209 = vmatprep.subr.mxu0 0.0
    %1210 = vmatpush1.msra.mxu0 0.0
    %1211 = vmatprep.subr.mxu0 0.0
    %1212 = vmatpush1.msra.mxu0 0.0
    %1213 = vmatprep.subr.mxu0 0.0
    %1214 = vmatpush1.msra.mxu0 0.0
    %1215 = vmatprep.subr.mxu0 0.0
    %1216 = vmatpush1.msra.mxu0 0.0
    %1217 = vmatprep.subr.mxu0 0.0
    %1218 = vmatpush1.msra.mxu0 0.0
    %1219 = vmatprep.subr.mxu0 0.0
    %1220 = vmatpush1.msra.mxu0 0.0
    %1221 = vmatprep.subr.mxu0 0.0
    %1222 = vmatpush1.msra.mxu0 0.0
    %1223 = vmatprep.subr.mxu0 0.0
    %1224 = vmatpush1.msra.mxu0 0.0
    %1225 = vmatprep.subr.mxu0 0.0
    %1226 = vmatpush1.msra.mxu0 0.0
    %1227 = vmatprep.subr.mxu0 0.0
    %1228 = vmatpush1.msra.mxu0 0.0
    %1229 = vmatprep.mubr.f32.mxu0 0.0
    %1230 = vmatmul.mubr.f32.gmra.mrb[0].mxu0 %v1163
    %v1231 = vpop.f32.mrb[0].mxu0
    %v1232 = vadd.f32 %v1159, %v1231
    %v1233 = vpop.f32.mrb[0].mxu0
    %1234 = vdwg.mxu0
    %v1235 = vmax.f32 %v1232, 0.0
    %v1236 = vlaneseq
    %v1237 = vshrl.u32 %v1236, 7
    %v1238 = vsub.s32 0, %v1237
    %v1239 = vrot.slane %v1154, %v1238
    %v1240 = vmul.f32 %v1235, %v1239
    %vm1241 = vcmask 261120
    %v1242 = vsel %vm1241, %v1240, 0.0
    %1243 = vadd.xlane.f32.xlu0 %v1242
    %v1244 = vpop.xlane.xlu0 %1243
    %v1245 = vlaneseq
    %v1246 = vshrl.u32 %v1245, 7
    %v1247 = vsub.s32 0, %v1246
    %v1248 = vrot.slane %v1155, %v1247
    %v1249 = vadd.f32 %v1244, %v1248
    %v1250 = vxor.u32 %v1249, 2147483648
    %v1251 = vmul.f32 %v1250, 1.442695
    %v1252 = vpow.pop %v1251
    %v1253 = vadd.f32 %v1252, 1.0
    %v1254 = vrcp.pop %v1253
    %v1255 = vmul.f32 1.0, %v1254
    %vm1256 = vcmask 7168
    %1257 = vst.msk [vmem:[%s3] sm:$0xff] %vm1256, %v1255
    // Predicated region
    $region18: #{tpu_custom_call.1} parent=1 // pred_check
      _
    $region19: #{tpu_custom_call.1} parent=1 // pred_check_branch
      %1259 = sbr.rel (0) target = $region21
    $region20: #{tpu_custom_call.1} parent=1 // pred_region
      _
    $region21: #{tpu_custom_call.1} parent=1 // pred_fallthru
      _
    // Predicated region
    $region22: #{tpu_custom_call.1} parent=1 // pred_check
      _
    $region23: #{tpu_custom_call.1} parent=1 // pred_check_branch
      %1261 = sbr.rel (0) target = $region25
    $region24: #{tpu_custom_call.1} parent=1 // pred_region
      _
    $region25: #{tpu_custom_call.1} parent=1 // pred_fallthru
      _
    %1262 = vsyncpa [#allocation3], 1

</llo_original>
